<compile_context>
chip_gen: v7x
topology: tpu7x:2x2x1
jax: 0.10.0
libtpu: 0.0.40
codegen_flags: <defaults>
</compile_context>

<pallas_src>
import functools

import jax
import jax.numpy as jnp
from jax.experimental import pallas as pl
from jax.experimental.pallas import tpu as pltpu


_LANE = 128      # last-dim alignment (lane width)
_SUBLANE = 8     # second-to-last-dim alignment


def _round_up(x, m):
    return (x + m - 1) // m * m


def _pad2d(a, rows, cols):
    r, c = a.shape
    if r == rows and c == cols:
        return a
    return jnp.pad(a, ((0, rows - r), (0, cols - c)))


@functools.lru_cache(maxsize=1)
def _vmem_budgets():
    """(vmem_limit_bytes, fused_path_budget_bytes), generation-aware."""
    cap = None
    try:
        info = pltpu.get_tpu_info()
        for name in ("vmem_capacity_bytes", "vmem_size_bytes", "vmem_bytes"):
            v = getattr(info, name, None)
            if v:
                cap = int(v)
                break
    except Exception:
        cap = None
    if cap is None:
        cap = 64 << 20  # conservative default: v7x per-TensorCore VMEM
    # Leave ~20 MiB headroom for compiler-internal scratch; cap at 100 MiB.
    vmem_limit = max(32 << 20, min(cap - (20 << 20), 100 << 20))
    # Fuse the whole MLP only when weights fit comfortably below the limit.
    fused_budget = (72 << 20) if cap >= (128 << 20) else (28 << 20)
    return vmem_limit, fused_budget


def _pick_tile_m(M, max_tile):
    """Adaptive batch tile: no tiling below max_tile, minimal padding above."""
    Mb = _round_up(M, _SUBLANE)
    if Mb <= max_tile:
        return Mb, Mb
    best_tm, best_mp = None, None
    for t in (max_tile, 384, 256, 128):
        if t > max_tile or t < _SUBLANE:
            continue
        mp = _round_up(M, t)
        if best_mp is None or mp < best_mp:
            best_tm, best_mp = t, mp
    return best_tm, best_mp


def _pick_feature_tile(dim, target=512):
    """(tile, padded_dim) for a feature (N or K) dimension.

    Single full-width block when the padded dim fits under `target`; otherwise
    pick the >=256-wide tile (512/384/256) minimizing zero padding, so the
    256-wide MXU on v6e/v7x never sees a 128-wide tile when tiling is needed.
    """
    dp = _round_up(dim, _LANE)
    if dp <= target:
        return dp, dp
    best = None
    for t in (512, 384, 256):
        padded = _round_up(dp, t)
        waste = padded - dp
        if best is None or waste < best[2]:
            best = (t, padded, waste)
    return best[0], best[1]


# ---------------------------------------------------------------------------
# Path 2: general tiled linear  y = relu?(x @ W + b)
# ---------------------------------------------------------------------------
def _linear_kernel(x_ref, w_ref, b_ref, o_ref, acc_ref, *, apply_relu):
    k = pl.program_id(2)

    @pl.when(k == 0)
    def _():
        acc_ref[...] = jnp.zeros_like(acc_ref)

    acc_ref[...] += jnp.dot(x_ref[...], w_ref[...],
                            preferred_element_type=jnp.float32)

    @pl.when(k == pl.num_programs(2) - 1)
    def _():
        acc = acc_ref[...] + b_ref[...].astype(jnp.float32)   # epilogue in f32
        if apply_relu:
            acc = jnp.maximum(acc, 0.0)
        o_ref[...] = acc.astype(o_ref.dtype)


def pallas_linear(x, w, b, *, apply_relu, out_dtype=None):
    """y = relu?(x @ w + b); x:(M,K), w:(K,N), b:(1,N).

    Operands are streamed in their storage dtype (cast to bf16 in the wrapper
    for the fast path); accumulation is always f32 in VMEM scratch.
    """
    M, K = x.shape
    K2, N = w.shape
    assert K2 == K and b.shape == (1, N)
    out_dtype = out_dtype or x.dtype

    tm, Mp = _pick_tile_m(M, max_tile=512)
    tn, Np = _pick_feature_tile(N)
    tk, Kp = _pick_feature_tile(K)

    xp = _pad2d(x, Mp, Kp)
    wp = _pad2d(w, Kp, Np)
    bp = _pad2d(b, 1, Np)

    grid = (Mp // tm, Np // tn, Kp // tk)
    kernel = functools.partial(_linear_kernel, apply_relu=apply_relu)

    x_item = jnp.dtype(x.dtype).itemsize
    w_item = jnp.dtype(w.dtype).itemsize
    b_item = jnp.dtype(b.dtype).itemsize
    o_item = jnp.dtype(out_dtype).itemsize
    # bytes_accessed reflects re-streaming: x is re-fetched per N tile, W per M tile.
    cost = pl.CostEstimate(
        flops=2 * Mp * Kp * Np,
        transcendentals=0,
        bytes_accessed=(x_item * Mp * Kp * (Np // tn)
                        + w_item * Kp * Np * (Mp // tm)
                        + b_item * Np
                        + o_item * Mp * Np),
    )

    vmem_limit, _ = _vmem_budgets()
    out = pl.pallas_call(
        kernel,
        out_shape=jax.ShapeDtypeStruct((Mp, Np), out_dtype),
        grid_spec=pltpu.PrefetchScalarGridSpec(
            num_scalar_prefetch=0,
            grid=grid,
            in_specs=[
                pl.BlockSpec((tm, tk), lambda i, j, k: (i, k)),   # x tile
                pl.BlockSpec((tk, tn), lambda i, j, k: (k, j)),   # W tile
                pl.BlockSpec((1, tn), lambda i, j, k: (0, j)),    # bias tile
            ],
            out_specs=pl.BlockSpec((tm, tn), lambda i, j, k: (i, j)),
            scratch_shapes=[pltpu.VMEM((tm, tn), jnp.float32)],
        ),
        compiler_params=pltpu.CompilerParams(
            dimension_semantics=("parallel", "parallel", "arbitrary"),
            vmem_limit_bytes=vmem_limit),
        cost_estimate=cost,
    )(xp, wp, bp)
    return out[:M, :N]


# ---------------------------------------------------------------------------
# Path 1: fully fused MLP (all layers in one kernel, activations stay in VMEM)
# ---------------------------------------------------------------------------
def _fused_mlp_kernel(*refs, num_layers):
    # refs = (x_ref, w0, b0, w1, b1, ..., o_ref)
    x_ref = refs[0]
    o_ref = refs[1 + 2 * num_layers]

    h = x_ref[...]                       # stays in storage/compute dtype
    for layer in range(num_layers):
        w = refs[1 + 2 * layer][...]
        b = refs[2 + 2 * layer][...]
        acc = jnp.dot(h, w, preferred_element_type=jnp.float32)
        acc = acc + b.astype(jnp.float32)          # bias + ReLU epilogue in f32
        if layer != num_layers - 1:
            acc = jnp.maximum(acc, 0.0)
            # dropout: identity (eval mode)
            h = acc.astype(x_ref.dtype)            # back to compute dtype
        else:
            h = acc
    o_ref[...] = h.astype(o_ref.dtype)


def pallas_mlp_fused(params, x, *, out_dtype=None, single_buffer_weights=True):
    M, K0 = x.shape
    n = len(params)
    out_dtype = out_dtype or x.dtype
    dims = [K0] + [w.shape[1] for (w, _) in params]
    dims_p = [_round_up(d, _LANE) for d in dims]

    tm, Mp = _pick_tile_m(M, max_tile=256)

    xp = _pad2d(x, Mp, dims_p[0])
    padded_wb = []
    for li, (w, b) in enumerate(params):
        padded_wb.append(_pad2d(w, dims_p[li], dims_p[li + 1]))
        padded_wb.append(_pad2d(b, 1, dims_p[li + 1]))

    def resident_spec(shape):
        # Constant index_map => block never changes; single-buffer it so the
        # resident weight footprint is not doubled (matters on v7x's 64 MiB).
        if single_buffer_weights:
            return pl.BlockSpec(shape, lambda i: (0, 0),
                                pipeline_mode=pl.Buffered(1))
        return pl.BlockSpec(shape, lambda i: (0, 0))

    in_specs = [pl.BlockSpec((tm, dims_p[0]), lambda i: (i, 0))]
    for li in range(n):
        in_specs.append(resident_spec((dims_p[li], dims_p[li + 1])))
        in_specs.append(resident_spec((1, dims_p[li + 1])))

    x_item = jnp.dtype(x.dtype).itemsize
    w_item = jnp.dtype(params[0][0].dtype).itemsize
    o_item = jnp.dtype(out_dtype).itemsize
    cost = pl.CostEstimate(
        flops=sum(2 * Mp * dims_p[i] * dims_p[i + 1] for i in range(n)),
        transcendentals=0,
        bytes_accessed=(x_item * Mp * dims_p[0]
                        + o_item * Mp * dims_p[-1]
                        + w_item * sum(dims_p[i] * dims_p[i + 1] for i in range(n))
                        + 4 * sum(dims_p[1:])),
    )

    vmem_limit, _ = _vmem_budgets()
    kernel = functools.partial(_fused_mlp_kernel, num_layers=n)
    out = pl.pallas_call(
        kernel,
        out_shape=jax.ShapeDtypeStruct((Mp, dims_p[-1]), out_dtype),
        grid_spec=pltpu.PrefetchScalarGridSpec(
            num_scalar_prefetch=0,
            grid=(Mp // tm,),
            in_specs=in_specs,
            out_specs=pl.BlockSpec((tm, dims_p[-1]), lambda i: (i, 0)),
        ),
        compiler_params=pltpu.CompilerParams(
            dimension_semantics=("parallel",),
            vmem_limit_bytes=vmem_limit),
        cost_estimate=cost,
    )(xp, *padded_wb)
    return out[:M, :dims[-1]]


def _fused_footprint_bytes(params, x):
    """VMEM footprint estimate for the fused path.

    Weights/biases are resident & single-buffered; only the x tile and output
    tile are double-buffered; intermediates live once in f32 (+ one
    compute-dtype copy).
    """
    M, K0 = x.shape
    dims_p = [_round_up(K0, _LANE)] + [_round_up(w.shape[1], _LANE)
                                       for (w, _) in params]
    tm, _ = _pick_tile_m(M, max_tile=256)
    x_item = jnp.dtype(x.dtype).itemsize
    w_item = jnp.dtype(params[0][0].dtype).itemsize
    weight_b = sum(dims_p[i] * dims_p[i + 1] for i in range(len(params))) * w_item
    bias_b = sum(dims_p[1:]) * 4
    io_b = 2 * tm * (dims_p[0] + dims_p[-1]) * x_item
    act_b = 2 * tm * max(dims_p) * 4
    return weight_b + bias_b + io_b + act_b


# ---------------------------------------------------------------------------
# Parameter init + forward
# ---------------------------------------------------------------------------
def init_mlp_params(key, input_dim, hidden_dim, output_dim, num_layers,
                    dtype=jnp.float32):
    """PyTorch-Linear-style init: U(-1/sqrt(fan_in), 1/sqrt(fan_in)).
    Weights stored transposed, shape (in_features, out_features)."""
    if num_layers == 1:
        dims = [(input_dim, output_dim)]
    else:
        dims = [(input_dim, hidden_dim)]
        dims += [(hidden_dim, hidden_dim)] * (num_layers - 2)
        dims += [(hidden_dim, output_dim)]

    params = []
    for (fan_in, fan_out) in dims:
        key, kw, kb = jax.random.split(key, 3)
        bound = 1.0 / (fan_in ** 0.5)
        w = jax.random.uniform(kw, (fan_in, fan_out), dtype, -bound, bound)
        b = jax.random.uniform(kb, (1, fan_out), dtype, -bound, bound)
        params.append((w, b))
    return params


def mlp_forward(params, x, *, compute_dtype=None):
    """Matches MLP.forward: Linear (+ReLU +Dropout) for all but the last layer.

    compute_dtype=jnp.bfloat16 casts weights and activations ONCE here (bf16
    storage halves HBM traffic on all generations; accumulation stays f32).
    Default None keeps exact f32 semantics.
    """
    out_dtype = x.dtype
    if compute_dtype is not None:
        params = [(w.astype(compute_dtype), b) for (w, b) in params]
        x = x.astype(compute_dtype)

    _, fused_budget = _vmem_budgets()
    if _fused_footprint_bytes(params, x) <= fused_budget:
        for single_buf in (True, False):
            try:
                return pallas_mlp_fused(params, x, out_dtype=out_dtype,
                                        single_buffer_weights=single_buf)
            except Exception:
                # If single-buffered resident specs (or fusion itself) are not
                # supported for this config, fall back to the tiled path.
                continue

    n = len(params)
    out = x
    for li, (w, b) in enumerate(params):
        last = (li == n - 1)
        out = pallas_linear(out, w, b, apply_relu=not last,
                            out_dtype=out_dtype if last else None)
    return out


def mlp_reference(params, x):
    n = len(params)
    for li, (w, b) in enumerate(params):
        x = x @ w + b
        if li != n - 1:
            x = jnp.maximum(x, 0.0)
    return x


if __name__ == "__main__":
    batch, input_dim, hidden_dim, output_dim, num_layers = 16, 16, 32, 8, 3

    key = jax.random.PRNGKey(0)
    key, kx = jax.random.split(key)
    x = jax.random.normal(kx, (batch, input_dim), jnp.float32)

    params = init_mlp_params(key, input_dim, hidden_dim, output_dim, num_layers)
    ref = mlp_reference(params, x)

    # Fused path (auto-selected for these small shapes), exact f32.
    out = jax.block_until_ready(mlp_forward(params, x))
    assert out.shape == (batch, output_dim)
    assert jnp.allclose(out, ref, atol=1e-5, rtol=1e-5)

    # Also exercise the general tiled per-layer kernel.
    out2 = x
    for li, (w, b) in enumerate(params):
        out2 = pallas_linear(out2, w, b, apply_relu=(li != num_layers - 1))
    out2 = jax.block_until_ready(out2)
    assert jnp.allclose(out2, ref, atol=1e-5, rtol=1e-5)

    # bf16 storage/compute path (f32 accumulation) -- looser tolerance.
    out3 = jax.block_until_ready(mlp_forward(params, x,
                                             compute_dtype=jnp.bfloat16))
    assert out3.shape == (batch, output_dim)
    assert jnp.allclose(out3, ref, atol=5e-2, rtol=5e-2)

    print("KERNEL_OK")
</pallas_src>

<mosaic_0001>
module attributes {stable_mosaic.version = 11 : i64} {
  func.func @_fused_mlp_kernel(%arg0: i32, %arg1: memref<16x128xf32, #tpu.memory_space<vmem>>, %arg2: memref<128x128xf32, #tpu.memory_space<vmem>>, %arg3: memref<1x128xf32, #tpu.memory_space<vmem>>, %arg4: memref<128x128xf32, #tpu.memory_space<vmem>>, %arg5: memref<1x128xf32, #tpu.memory_space<vmem>>, %arg6: memref<128x128xf32, #tpu.memory_space<vmem>>, %arg7: memref<1x128xf32, #tpu.memory_space<vmem>>, %arg8: memref<16x128xf32, #tpu.memory_space<vmem>>) attributes {dimension_semantics = [#tpu.dimension_semantics<parallel>], iteration_bounds = array<i64: 1>, scalar_prefetch = 0 : i64, scratch_operands = 0 : i64, tpu.core_type = #tpu.core_type<tc>, window_params = [{transform_indices = @transform_0, window_bounds = array<i64: 16, 128>}, {pipeline_mode = #tpu.pipeline_mode<synchronous>, transform_indices = @transform_1, window_bounds = array<i64: 128, 128>}, {pipeline_mode = #tpu.pipeline_mode<synchronous>, transform_indices = @transform_2, window_bounds = array<i64: 1, 128>}, {pipeline_mode = #tpu.pipeline_mode<synchronous>, transform_indices = @transform_3, window_bounds = array<i64: 128, 128>}, {pipeline_mode = #tpu.pipeline_mode<synchronous>, transform_indices = @transform_4, window_bounds = array<i64: 1, 128>}, {pipeline_mode = #tpu.pipeline_mode<synchronous>, transform_indices = @transform_5, window_bounds = array<i64: 128, 128>}, {pipeline_mode = #tpu.pipeline_mode<synchronous>, transform_indices = @transform_6, window_bounds = array<i64: 1, 128>}, {transform_indices = @transform_7, window_bounds = array<i64: 16, 128>}]} {
    %c0 = arith.constant 0 : index
    %c0_0 = arith.constant 0 : index
    %0 = vector.load %arg1[%c0, %c0_0] : memref<16x128xf32, #tpu.memory_space<vmem>>, vector<16x128xf32>
    %c0_1 = arith.constant 0 : index
    %c0_2 = arith.constant 0 : index
    %1 = vector.load %arg2[%c0_1, %c0_2] : memref<128x128xf32, #tpu.memory_space<vmem>>, vector<128x128xf32>
    %c0_3 = arith.constant 0 : index
    %c0_4 = arith.constant 0 : index
    %2 = vector.load %arg3[%c0_3, %c0_4] : memref<1x128xf32, #tpu.memory_space<vmem>>, vector<1x128xf32>
    %cst = arith.constant dense<0.000000e+00> : vector<16x128xf32>
    %3 = tpu.matmul %0, %1, %cst {dimension_numbers = #tpu.dot_dimension_numbers<[1], [0], [0], [1], [0, 0, 1, 1], [], []>} : vector<16x128xf32>, vector<128x128xf32>, vector<16x128xf32> -> vector<16x128xf32>
    %4 = vector.broadcast %2 : vector<1x128xf32> to vector<16x128xf32>
    %5 = arith.addf %3, %4 : vector<16x128xf32>
    %cst_5 = arith.constant 0.000000e+00 : f32
    %6 = vector.broadcast %cst_5 : f32 to vector<16x128xf32>
    %7 = arith.maximumf %5, %6 : vector<16x128xf32>
    %c0_6 = arith.constant 0 : index
    %c0_7 = arith.constant 0 : index
    %8 = vector.load %arg4[%c0_6, %c0_7] : memref<128x128xf32, #tpu.memory_space<vmem>>, vector<128x128xf32>
    %c0_8 = arith.constant 0 : index
    %c0_9 = arith.constant 0 : index
    %9 = vector.load %arg5[%c0_8, %c0_9] : memref<1x128xf32, #tpu.memory_space<vmem>>, vector<1x128xf32>
    %cst_10 = arith.constant dense<0.000000e+00> : vector<16x128xf32>
    %10 = tpu.matmul %7, %8, %cst_10 {dimension_numbers = #tpu.dot_dimension_numbers<[1], [0], [0], [1], [0, 0, 1, 1], [], []>} : vector<16x128xf32>, vector<128x128xf32>, vector<16x128xf32> -> vector<16x128xf32>
    %11 = vector.broadcast %9 : vector<1x128xf32> to vector<16x128xf32>
    %12 = arith.addf %10, %11 : vector<16x128xf32>
    %cst_11 = arith.constant 0.000000e+00 : f32
    %13 = vector.broadcast %cst_11 : f32 to vector<16x128xf32>
    %14 = arith.maximumf %12, %13 : vector<16x128xf32>
    %c0_12 = arith.constant 0 : index
    %c0_13 = arith.constant 0 : index
    %15 = vector.load %arg6[%c0_12, %c0_13] : memref<128x128xf32, #tpu.memory_space<vmem>>, vector<128x128xf32>
    %c0_14 = arith.constant 0 : index
    %c0_15 = arith.constant 0 : index
    %16 = vector.load %arg7[%c0_14, %c0_15] : memref<1x128xf32, #tpu.memory_space<vmem>>, vector<1x128xf32>
    %cst_16 = arith.constant dense<0.000000e+00> : vector<16x128xf32>
    %17 = tpu.matmul %14, %15, %cst_16 {dimension_numbers = #tpu.dot_dimension_numbers<[1], [0], [0], [1], [0, 0, 1, 1], [], []>} : vector<16x128xf32>, vector<128x128xf32>, vector<16x128xf32> -> vector<16x128xf32>
    %18 = vector.broadcast %16 : vector<1x128xf32> to vector<16x128xf32>
    %19 = arith.addf %17, %18 : vector<16x128xf32>
    %c0_17 = arith.constant 0 : index
    %c0_18 = arith.constant 0 : index
    %20 = vector.load %arg8[%c0_17, %c0_18] : memref<16x128xf32, #tpu.memory_space<vmem>>, vector<16x128xf32>
    tpu.vector_store %arg8[%c0_17, %c0_18], %19 {strides = array<i32>} : memref<16x128xf32, #tpu.memory_space<vmem>>, vector<16x128xf32>,
    return
  }
  func.func @transform_0(%arg0: i32) -> (i32, i32) {
    %c0_i32 = arith.constant 0 : i32
    %c0_i32_0 = arith.constant 0 : i32
    return %arg0, %c0_i32 : i32, i32
  }
  func.func @transform_1(%arg0: i32) -> (i32, i32) {
    %c0_i32 = arith.constant 0 : i32
    %c0_i32_0 = arith.constant 0 : i32
    %c0_i32_1 = arith.constant 0 : i32
    return %c0_i32, %c0_i32_0 : i32, i32
  }
  func.func @transform_2(%arg0: i32) -> (i32, i32) {
    %c0_i32 = arith.constant 0 : i32
    %c0_i32_0 = arith.constant 0 : i32
    %c0_i32_1 = arith.constant 0 : i32
    return %c0_i32, %c0_i32_0 : i32, i32
  }
  func.func @transform_3(%arg0: i32) -> (i32, i32) {
    %c0_i32 = arith.constant 0 : i32
    %c0_i32_0 = arith.constant 0 : i32
    %c0_i32_1 = arith.constant 0 : i32
    return %c0_i32, %c0_i32_0 : i32, i32
  }
  func.func @transform_4(%arg0: i32) -> (i32, i32) {
    %c0_i32 = arith.constant 0 : i32
    %c0_i32_0 = arith.constant 0 : i32
    %c0_i32_1 = arith.constant 0 : i32
    return %c0_i32, %c0_i32_0 : i32, i32
  }
  func.func @transform_5(%arg0: i32) -> (i32, i32) {
    %c0_i32 = arith.constant 0 : i32
    %c0_i32_0 = arith.constant 0 : i32
    %c0_i32_1 = arith.constant 0 : i32
    return %c0_i32, %c0_i32_0 : i32, i32
  }
  func.func @transform_6(%arg0: i32) -> (i32, i32) {
    %c0_i32 = arith.constant 0 : i32
    %c0_i32_0 = arith.constant 0 : i32
    %c0_i32_1 = arith.constant 0 : i32
    return %c0_i32, %c0_i32_0 : i32, i32
  }
  func.func @transform_7(%arg0: i32) -> (i32, i32) {
    %c0_i32 = arith.constant 0 : i32
    %c0_i32_0 = arith.constant 0 : i32
    return %arg0, %c0_i32 : i32, i32
  }
}

module attributes {stable_mosaic.version = 11 : i64} {
  func.func @_fused_mlp_kernel(%arg0: i32, %arg1: memref<16x128xf32, #tpu.memory_space<vmem>>, %arg2: memref<128x128xf32, #tpu.memory_space<vmem>>, %arg3: memref<1x128xf32, #tpu.memory_space<vmem>>, %arg4: memref<128x128xf32, #tpu.memory_space<vmem>>, %arg5: memref<1x128xf32, #tpu.memory_space<vmem>>, %arg6: memref<128x128xf32, #tpu.memory_space<vmem>>, %arg7: memref<1x128xf32, #tpu.memory_space<vmem>>, %arg8: memref<16x128xf32, #tpu.memory_space<vmem>>) attributes {dimension_semantics = [#tpu.dimension_semantics<parallel>], iteration_bounds = array<i64: 1>, scalar_prefetch = 0 : i64, scratch_operands = 0 : i64, tpu.core_type = #tpu.core_type<tc>, window_params = [{transform_indices = @transform_0, window_bounds = array<i64: 16, 128>}, {pipeline_mode = #tpu.pipeline_mode<synchronous>, transform_indices = @transform_1, window_bounds = array<i64: 128, 128>}, {pipeline_mode = #tpu.pipeline_mode<synchronous>, transform_indices = @transform_2, window_bounds = array<i64: 1, 128>}, {pipeline_mode = #tpu.pipeline_mode<synchronous>, transform_indices = @transform_3, window_bounds = array<i64: 128, 128>}, {pipeline_mode = #tpu.pipeline_mode<synchronous>, transform_indices = @transform_4, window_bounds = array<i64: 1, 128>}, {pipeline_mode = #tpu.pipeline_mode<synchronous>, transform_indices = @transform_5, window_bounds = array<i64: 128, 128>}, {pipeline_mode = #tpu.pipeline_mode<synchronous>, transform_indices = @transform_6, window_bounds = array<i64: 1, 128>}, {transform_indices = @transform_7, window_bounds = array<i64: 16, 128>}]} {
    %c0 = arith.constant 0 : index
    %c0_0 = arith.constant 0 : index
    %0 = vector.load %arg1[%c0, %c0_0] : memref<16x128xf32, #tpu.memory_space<vmem>>, vector<16x128xf32>
    %c0_1 = arith.constant 0 : index
    %c0_2 = arith.constant 0 : index
    %1 = vector.load %arg2[%c0_1, %c0_2] : memref<128x128xf32, #tpu.memory_space<vmem>>, vector<128x128xf32>
    %c0_3 = arith.constant 0 : index
    %c0_4 = arith.constant 0 : index
    %2 = vector.load %arg3[%c0_3, %c0_4] : memref<1x128xf32, #tpu.memory_space<vmem>>, vector<1x128xf32>
    %cst = arith.constant dense<0.000000e+00> : vector<16x128xf32>
    %3 = tpu.matmul %0, %1, %cst {dimension_numbers = #tpu.dot_dimension_numbers<[1], [0], [0], [1], [0, 0, 1, 1], [], []>} : vector<16x128xf32>, vector<128x128xf32>, vector<16x128xf32> -> vector<16x128xf32>
    %4 = vector.broadcast %2 : vector<1x128xf32> to vector<16x128xf32>
    %5 = arith.addf %3, %4 : vector<16x128xf32>
    %cst_5 = arith.constant 0.000000e+00 : f32
    %6 = vector.broadcast %cst_5 : f32 to vector<16x128xf32>
    %7 = arith.maximumf %5, %6 : vector<16x128xf32>
    %c0_6 = arith.constant 0 : index
    %c0_7 = arith.constant 0 : index
    %8 = vector.load %arg4[%c0_6, %c0_7] : memref<128x128xf32, #tpu.memory_space<vmem>>, vector<128x128xf32>
    %c0_8 = arith.constant 0 : index
    %c0_9 = arith.constant 0 : index
    %9 = vector.load %arg5[%c0_8, %c0_9] : memref<1x128xf32, #tpu.memory_space<vmem>>, vector<1x128xf32>
    %cst_10 = arith.constant dense<0.000000e+00> : vector<16x128xf32>
    %10 = tpu.matmul %7, %8, %cst_10 {dimension_numbers = #tpu.dot_dimension_numbers<[1], [0], [0], [1], [0, 0, 1, 1], [], []>} : vector<16x128xf32>, vector<128x128xf32>, vector<16x128xf32> -> vector<16x128xf32>
    %11 = vector.broadcast %9 : vector<1x128xf32> to vector<16x128xf32>
    %12 = arith.addf %10, %11 : vector<16x128xf32>
    %cst_11 = arith.constant 0.000000e+00 : f32
    %13 = vector.broadcast %cst_11 : f32 to vector<16x128xf32>
    %14 = arith.maximumf %12, %13 : vector<16x128xf32>
    %c0_12 = arith.constant 0 : index
    %c0_13 = arith.constant 0 : index
    %15 = vector.load %arg6[%c0_12, %c0_13] : memref<128x128xf32, #tpu.memory_space<vmem>>, vector<128x128xf32>
    %c0_14 = arith.constant 0 : index
    %c0_15 = arith.constant 0 : index
    %16 = vector.load %arg7[%c0_14, %c0_15] : memref<1x128xf32, #tpu.memory_space<vmem>>, vector<1x128xf32>
    %cst_16 = arith.constant dense<0.000000e+00> : vector<16x128xf32>
    %17 = tpu.matmul %14, %15, %cst_16 {dimension_numbers = #tpu.dot_dimension_numbers<[1], [0], [0], [1], [0, 0, 1, 1], [], []>} : vector<16x128xf32>, vector<128x128xf32>, vector<16x128xf32> -> vector<16x128xf32>
    %18 = vector.broadcast %16 : vector<1x128xf32> to vector<16x128xf32>
    %19 = arith.addf %17, %18 : vector<16x128xf32>
    %c0_17 = arith.constant 0 : index
    %c0_18 = arith.constant 0 : index
    %20 = vector.load %arg8[%c0_17, %c0_18] : memref<16x128xf32, #tpu.memory_space<vmem>>, vector<16x128xf32>
    tpu.vector_store %arg8[%c0_17, %c0_18], %19 {strides = array<i32>} : memref<16x128xf32, #tpu.memory_space<vmem>>, vector<16x128xf32>,
    return
  }
  func.func @transform_0(%arg0: i32) -> (i32, i32) {
    %c0_i32 = arith.constant 0 : i32
    %c0_i32_0 = arith.constant 0 : i32
    return %arg0, %c0_i32 : i32, i32
  }
  func.func @transform_1(%arg0: i32) -> (i32, i32) {
    %c0_i32 = arith.constant 0 : i32
    %c0_i32_0 = arith.constant 0 : i32
    %c0_i32_1 = arith.constant 0 : i32
    return %c0_i32, %c0_i32_0 : i32, i32
  }
  func.func @transform_2(%arg0: i32) -> (i32, i32) {
    %c0_i32 = arith.constant 0 : i32
    %c0_i32_0 = arith.constant 0 : i32
    %c0_i32_1 = arith.constant 0 : i32
    return %c0_i32, %c0_i32_0 : i32, i32
  }
  func.func @transform_3(%arg0: i32) -> (i32, i32) {
    %c0_i32 = arith.constant 0 : i32
    %c0_i32_0 = arith.constant 0 : i32
    %c0_i32_1 = arith.constant 0 : i32
    return %c0_i32, %c0_i32_0 : i32, i32
  }
  func.func @transform_4(%arg0: i32) -> (i32, i32) {
    %c0_i32 = arith.constant 0 : i32
    %c0_i32_0 = arith.constant 0 : i32
    %c0_i32_1 = arith.constant 0 : i32
    return %c0_i32, %c0_i32_0 : i32, i32
  }
  func.func @transform_5(%arg0: i32) -> (i32, i32) {
    %c0_i32 = arith.constant 0 : i32
    %c0_i32_0 = arith.constant 0 : i32
    %c0_i32_1 = arith.constant 0 : i32
    return %c0_i32, %c0_i32_0 : i32, i32
  }
  func.func @transform_6(%arg0: i32) -> (i32, i32) {
    %c0_i32 = arith.constant 0 : i32
    %c0_i32_0 = arith.constant 0 : i32
    %c0_i32_1 = arith.constant 0 : i32
    return %c0_i32, %c0_i32_0 : i32, i32
  }
  func.func @transform_7(%arg0: i32) -> (i32, i32) {
    %c0_i32 = arith.constant 0 : i32
    %c0_i32_0 = arith.constant 0 : i32
    return %arg0, %c0_i32 : i32, i32
  }
}

module attributes {stable_mosaic.version = 11 : i64} {
  func.func @_linear_kernel(%arg0: i32, %arg1: i32, %arg2: i32, %arg3: memref<16x128xf32, #tpu.memory_space<vmem>>, %arg4: memref<128x128xf32, #tpu.memory_space<vmem>>, %arg5: memref<1x128xf32, #tpu.memory_space<vmem>>, %arg6: memref<16x128xf32, #tpu.memory_space<vmem>>, %arg7: memref<16x128xf32, #tpu.memory_space<vmem>>) attributes {dimension_semantics = [#tpu.dimension_semantics<parallel>, #tpu.dimension_semantics<parallel>, #tpu.dimension_semantics<arbitrary>], iteration_bounds = array<i64: 1, 1, 1>, scalar_prefetch = 0 : i64, scratch_operands = 1 : i64, tpu.core_type = #tpu.core_type<tc>, window_params = [{transform_indices = @transform_0, window_bounds = array<i64: 16, 128>}, {transform_indices = @transform_1, window_bounds = array<i64: 128, 128>}, {transform_indices = @transform_2, window_bounds = array<i64: 1, 128>}, {transform_indices = @transform_3, window_bounds = array<i64: 16, 128>}]} {
    %c0_i32 = arith.constant 0 : i32
    %0 = arith.cmpi eq, %arg2, %c0_i32 : i32
    %1 = arith.extui %0 : i1 to i32
    %c0_i32_0 = arith.constant 0 : i32
    %2 = arith.cmpi ne, %1, %c0_i32_0 : i32
    scf.if %2 {
      %cst_10 = arith.constant 0.000000e+00 : f32
      %12 = vector.broadcast %cst_10 : f32 to vector<16x128xf32>
      %c0_11 = arith.constant 0 : index
      %c0_12 = arith.constant 0 : index
      %13 = vector.load %arg7[%c0_11, %c0_12] : memref<16x128xf32, #tpu.memory_space<vmem>>, vector<16x128xf32>
      tpu.vector_store %arg7[%c0_11, %c0_12], %12 {strides = array<i32>} : memref<16x128xf32, #tpu.memory_space<vmem>>, vector<16x128xf32>,
    } else {
    }
    %c0 = arith.constant 0 : index
    %c0_1 = arith.constant 0 : index
    %3 = vector.load %arg7[%c0, %c0_1] : memref<16x128xf32, #tpu.memory_space<vmem>>, vector<16x128xf32>
    %c0_2 = arith.constant 0 : index
    %c0_3 = arith.constant 0 : index
    %4 = vector.load %arg3[%c0_2, %c0_3] : memref<16x128xf32, #tpu.memory_space<vmem>>, vector<16x128xf32>
    %c0_4 = arith.constant 0 : index
    %c0_5 = arith.constant 0 : index
    %5 = vector.load %arg4[%c0_4, %c0_5] : memref<128x128xf32, #tpu.memory_space<vmem>>, vector<128x128xf32>
    %cst = arith.constant dense<0.000000e+00> : vector<16x128xf32>
    %6 = tpu.matmul %4, %5, %cst {dimension_numbers = #tpu.dot_dimension_numbers<[1], [0], [0], [1], [0, 0, 1, 1], [], []>} : vector<16x128xf32>, vector<128x128xf32>, vector<16x128xf32> -> vector<16x128xf32>
    %7 = arith.addf %3, %6 : vector<16x128xf32>
    %c0_6 = arith.constant 0 : index
    %c0_7 = arith.constant 0 : index
    %8 = vector.load %arg7[%c0_6, %c0_7] : memref<16x128xf32, #tpu.memory_space<vmem>>, vector<16x128xf32>
    tpu.vector_store %arg7[%c0_6, %c0_7], %7 {strides = array<i32>} : memref<16x128xf32, #tpu.memory_space<vmem>>, vector<16x128xf32>,
    %c0_i32_8 = arith.constant 0 : i32
    %9 = arith.cmpi eq, %arg2, %c0_i32_8 : i32
    %10 = arith.extui %9 : i1 to i32
    %c0_i32_9 = arith.constant 0 : i32
    %11 = arith.cmpi ne, %10, %c0_i32_9 : i32
    scf.if %11 {
      %c0_10 = arith.constant 0 : index
      %c0_11 = arith.constant 0 : index
      %12 = vector.load %arg7[%c0_10, %c0_11] : memref<16x128xf32, #tpu.memory_space<vmem>>, vector<16x128xf32>
      %c0_12 = arith.constant 0 : index
      %c0_13 = arith.constant 0 : index
      %13 = vector.load %arg5[%c0_12, %c0_13] : memref<1x128xf32, #tpu.memory_space<vmem>>, vector<1x128xf32>
      %14 = vector.broadcast %13 : vector<1x128xf32> to vector<16x128xf32>
      %15 = arith.addf %12, %14 : vector<16x128xf32>
      %cst_14 = arith.constant 0.000000e+00 : f32
      %16 = vector.broadcast %cst_14 : f32 to vector<16x128xf32>
      %17 = arith.maximumf %15, %16 : vector<16x128xf32>
      %c0_15 = arith.constant 0 : index
      %c0_16 = arith.constant 0 : index
      %18 = vector.load %arg6[%c0_15, %c0_16] : memref<16x128xf32, #tpu.memory_space<vmem>>, vector<16x128xf32>
      tpu.vector_store %arg6[%c0_15, %c0_16], %17 {strides = array<i32>} : memref<16x128xf32, #tpu.memory_space<vmem>>, vector<16x128xf32>,
    } else {
    }
    return
  }
  func.func @transform_0(%arg0: i32, %arg1: i32, %arg2: i32) -> (i32, i32) {
    %c0_i32 = arith.constant 0 : i32
    return %arg0, %arg2 : i32, i32
  }
  func.func @transform_1(%arg0: i32, %arg1: i32, %arg2: i32) -> (i32, i32) {
    %c0_i32 = arith.constant 0 : i32
    return %arg2, %arg1 : i32, i32
  }
  func.func @transform_2(%arg0: i32, %arg1: i32, %arg2: i32) -> (i32, i32) {
    %c0_i32 = arith.constant 0 : i32
    %c0_i32_0 = arith.constant 0 : i32
    return %c0_i32, %arg1 : i32, i32
  }
  func.func @transform_3(%arg0: i32, %arg1: i32, %arg2: i32) -> (i32, i32) {
    %c0_i32 = arith.constant 0 : i32
    return %arg0, %arg1 : i32, i32
  }
}

</mosaic_0001>

<llo_original>
// kernel: tpu_custom_call.1
$region0: #{tpu_custom_call.1}
  #allocation0 [shape = 'u32[]', space=smem, size = 0x4, offset = 0x4, fixed_abs, tag = 'smem constant byte address 0x4 - core index']
  #allocation1 [shape = 'u32[144,128]{1,0:T(1,128)}', space=vmem, size = 0x12000, scoped, tag = 'internal scratch']
  %s0 = inlined_call_operand.hbm [shape: f32[16,128], index: 0, kind: input, shape index: {}]
  %s1 = inlined_call_operand.hbm [shape: f32[128,128], index: 1, kind: input, shape index: {}]
  %s2 = inlined_call_operand.vmem [shape: f32[1,128], index: 2, kind: input, shape index: {}]
  %s3 = inlined_call_operand.hbm [shape: f32[128,128], index: 3, kind: input, shape index: {}]
  %s4 = inlined_call_operand.vmem [shape: f32[1,128], index: 4, kind: input, shape index: {}]
  %s5 = inlined_call_operand.hbm [shape: f32[128,128], index: 5, kind: input, shape index: {}]
  %s6 = inlined_call_operand.vmem [shape: f32[1,128], index: 6, kind: input, shape index: {}]
  %s7 = inlined_call_operand.hbm [shape: f32[16,128], index: 7, kind: output, shape index: {}]
  %s8 = sld [smem:[#allocation0]]
  $region54: #{tpu_custom_call.1} parent=0
    _
  %s10 = ssub.s32 1, %s8
  %s11 = scalar_select 0, %s10, %s8
  $region1: #{tpu_custom_call.1} parent=0
    #allocation2 [shape = 'u8[8192]{0}', space=vmem, size = 0x2000, scoped, tag = 'input window, operand 0, single buffered']
    #allocation3 [shape = 's32[1]{0}', space=sflag, size = 0x4, scoped, tag = 'scoped memory for tpu_custom_call.1']
    #allocation4 [shape = 's32[1]{0}', space=sflag, size = 0x4, scoped, tag = 'scoped memory for tpu_custom_call.1']
    #allocation5 [shape = 'u8[65536]{0}', space=vmem, size = 0x10000, scoped, tag = 'input window, operand 1, single buffered']
    #allocation6 [shape = 's32[1]{0}', space=sflag, size = 0x4, scoped, tag = 'scoped memory for tpu_custom_call.1']
    #allocation7 [shape = 'u8[65536]{0}', space=vmem, size = 0x10000, scoped, tag = 'input window, operand 3, single buffered']
    #allocation8 [shape = 'u8[65536]{0}', space=vmem, size = 0x10000, scoped, tag = 'input window, operand 5, single buffered']
    #allocation9 [shape = 's32[1]{0}', space=sflag, size = 0x4, scoped, tag = 'scoped memory for tpu_custom_call.1']
    #allocation10 [shape = 'u8[8192]{0}', space=vmem, size = 0x2000, scoped, tag = 'output window, operand 0, single buffered']
    %12 = vsyncpa [#allocation3], 0
    %13 = vsyncpa [#allocation6], 0
    %14 = vsyncpa [#allocation9], 0
    %15 = vsyncpa [#allocation4], 0
    // Predicated region
    $region2: #{tpu_custom_call.1} parent=1 // pred_check
      _
    $region3: #{tpu_custom_call.1} parent=1 // pred_check_branch
      %17 = sbr.rel (0) target = $region5
    $region4: #{tpu_custom_call.1} parent=1 // pred_region
      %s19 = ssub.s32 256, 256
      %20 = vsyncadd [#allocation3], %s19
      %s21 = sshll.u32 [#allocation2], 4
      %s22 = int_to_ptr.vmem [resolvable:$true] %s21
      %27 = dma.hbm_to_vmem [thread:$0]  %s0, 256, %s22, [#allocation3], 128, 128, 8
    $region5: #{tpu_custom_call.1} parent=1 // pred_fallthru
      _
    // Predicated region
    $region6: #{tpu_custom_call.1} parent=1 // pred_check
      _
    $region7: #{tpu_custom_call.1} parent=1 // pred_check_branch
      %29 = sbr.rel (0) target = $region9
    $region8: #{tpu_custom_call.1} parent=1 // pred_region
      %s31 = ssub.s32 2048, 2048
      %32 = vsyncadd [#allocation6], %s31
      %s33 = sshll.u32 [#allocation5], 4
      %s34 = int_to_ptr.vmem [resolvable:$true] %s33
      %39 = dma.hbm_to_vmem [thread:$0]  %s1, 2048, %s34, [#allocation6], 128, 128, 8
    $region9: #{tpu_custom_call.1} parent=1 // pred_fallthru
      _
    // Predicated region
    $region10: #{tpu_custom_call.1} parent=1 // pred_check
      _
    $region11: #{tpu_custom_call.1} parent=1 // pred_check_branch
      %41 = sbr.rel (0) target = $region13
    $region12: #{tpu_custom_call.1} parent=1 // pred_region
      _
    $region13: #{tpu_custom_call.1} parent=1 // pred_fallthru
      _
    // Predicated region
    $region14: #{tpu_custom_call.1} parent=1 // pred_check
      _
    $region15: #{tpu_custom_call.1} parent=1 // pred_check_branch
      %43 = sbr.rel (0) target = $region17
    $region16: #{tpu_custom_call.1} parent=1 // pred_region
      %s45 = ssub.s32 2048, 2048
      %46 = vsyncadd [#allocation6], %s45
      %s47 = sshll.u32 [#allocation7], 4
      %s48 = int_to_ptr.vmem [resolvable:$true] %s47
      %53 = dma.hbm_to_vmem [thread:$0]  %s3, 2048, %s48, [#allocation6], 128, 128, 8
    $region17: #{tpu_custom_call.1} parent=1 // pred_fallthru
      _
    // Predicated region
    $region18: #{tpu_custom_call.1} parent=1 // pred_check
      _
    $region19: #{tpu_custom_call.1} parent=1 // pred_check_branch
      %55 = sbr.rel (0) target = $region21
    $region20: #{tpu_custom_call.1} parent=1 // pred_region
      _
    $region21: #{tpu_custom_call.1} parent=1 // pred_fallthru
      _
    // Predicated region
    $region22: #{tpu_custom_call.1} parent=1 // pred_check
      _
    $region23: #{tpu_custom_call.1} parent=1 // pred_check_branch
      %57 = sbr.rel (0) target = $region25
    $region24: #{tpu_custom_call.1} parent=1 // pred_region
      %s59 = ssub.s32 2048, 2048
      %60 = vsyncadd [#allocation9], %s59
      %s61 = sshll.u32 [#allocation8], 4
      %s62 = int_to_ptr.vmem [resolvable:$true] %s61
      %67 = dma.hbm_to_vmem [thread:$0]  %s5, 2048, %s62, [#allocation9], 128, 128, 8
    $region25: #{tpu_custom_call.1} parent=1 // pred_fallthru
      _
    // Predicated region
    $region26: #{tpu_custom_call.1} parent=1 // pred_check
      _
    $region27: #{tpu_custom_call.1} parent=1 // pred_check_branch
      %69 = sbr.rel (0) target = $region29
    $region28: #{tpu_custom_call.1} parent=1 // pred_region
      _
    $region29: #{tpu_custom_call.1} parent=1 // pred_fallthru
      _
    // Predicated region
    $region30: #{tpu_custom_call.1} parent=1 // pred_check
      _
    $region31: #{tpu_custom_call.1} parent=1 // pred_check_branch
      %71 = sbr.rel (0) target = $region33
    $region32: #{tpu_custom_call.1} parent=1 // pred_region
      %72 = dma.done [#allocation3], 256
    $region33: #{tpu_custom_call.1} parent=1 // pred_fallthru
      _
    // Predicated region
    $region34: #{tpu_custom_call.1} parent=1 // pred_check
      _
    $region35: #{tpu_custom_call.1} parent=1 // pred_check_branch
      %74 = sbr.rel (0) target = $region37
    $region36: #{tpu_custom_call.1} parent=1 // pred_region
      %75 = dma.done [#allocation6], 2048
    $region37: #{tpu_custom_call.1} parent=1 // pred_fallthru
      _
    // Predicated region
    $region38: #{tpu_custom_call.1} parent=1 // pred_check
      _
    $region39: #{tpu_custom_call.1} parent=1 // pred_check_branch
      %77 = sbr.rel (0) target = $region41
    $region40: #{tpu_custom_call.1} parent=1 // pred_region
      %78 = dma.done [#allocation6], 2048
    $region41: #{tpu_custom_call.1} parent=1 // pred_fallthru
      _
    // Predicated region
    $region42: #{tpu_custom_call.1} parent=1 // pred_check
      _
    $region43: #{tpu_custom_call.1} parent=1 // pred_check_branch
      %80 = sbr.rel (0) target = $region45
    $region44: #{tpu_custom_call.1} parent=1 // pred_region
      %81 = dma.done [#allocation9], 2048
    $region45: #{tpu_custom_call.1} parent=1 // pred_fallthru
      _
    %v82 = vld [vmem:[#allocation2] sm:$0xff]
    %v83 = vld [vmem:[#allocation2 + $0x8] sm:$0xff]
    %v84 = vld [vmem:[#allocation5] sm:$0xff]
    %v85 = vld [vmem:[#allocation5 + $0x8] sm:$0xff]
    %v86 = vld [vmem:[#allocation5 + $0x10] sm:$0xff]
    %v87 = vld [vmem:[#allocation5 + $0x18] sm:$0xff]
    %v88 = vld [vmem:[#allocation5 + $0x20] sm:$0xff]
    %v89 = vld [vmem:[#allocation5 + $0x28] sm:$0xff]
    %v90 = vld [vmem:[#allocation5 + $0x30] sm:$0xff]
    %v91 = vld [vmem:[#allocation5 + $0x38] sm:$0xff]
    %v92 = vld [vmem:[#allocation5 + $0x40] sm:$0xff]
    %v93 = vld [vmem:[#allocation5 + $0x48] sm:$0xff]
    %v94 = vld [vmem:[#allocation5 + $0x50] sm:$0xff]
    %v95 = vld [vmem:[#allocation5 + $0x58] sm:$0xff]
    %v96 = vld [vmem:[#allocation5 + $0x60] sm:$0xff]
    %v97 = vld [vmem:[#allocation5 + $0x68] sm:$0xff]
    %v98 = vld [vmem:[#allocation5 + $0x70] sm:$0xff]
    %v99 = vld [vmem:[#allocation5 + $0x78] sm:$0xff]
    %v100 = vld [vmem:[%s2] sm:$0x1]
    %v102 = vlaneseq
    %v103 = vshrl.u32 %v102, 7
    %v104 = vsub.s32 0, %v103
    %v105 = vrot.slane %v100, %v104
    %107 = vmatprep.subr.mxu0 0.0
    %108 = vmatpush1.msra.mxu0 %v84
    %109 = vmatprep.subr.mxu0 0.0
    %110 = vmatpush1.msra.mxu0 %v85
    %111 = vmatprep.subr.mxu0 0.0
    %112 = vmatpush1.msra.mxu0 %v86
    %113 = vmatprep.subr.mxu0 0.0
    %114 = vmatpush1.msra.mxu0 %v87
    %115 = vmatprep.subr.mxu0 0.0
    %116 = vmatpush1.msra.mxu0 %v88
    %117 = vmatprep.subr.mxu0 0.0
    %118 = vmatpush1.msra.mxu0 %v89
    %119 = vmatprep.subr.mxu0 0.0
    %120 = vmatpush1.msra.mxu0 %v90
    %121 = vmatprep.subr.mxu0 0.0
    %122 = vmatpush1.msra.mxu0 %v91
    %123 = vmatprep.subr.mxu0 0.0
    %124 = vmatpush1.msra.mxu0 %v92
    %125 = vmatprep.subr.mxu0 0.0
    %126 = vmatpush1.msra.mxu0 %v93
    %127 = vmatprep.subr.mxu0 0.0
    %128 = vmatpush1.msra.mxu0 %v94
    %129 = vmatprep.subr.mxu0 0.0
    %130 = vmatpush1.msra.mxu0 %v95
    %131 = vmatprep.subr.mxu0 0.0
    %132 = vmatpush1.msra.mxu0 %v96
    %133 = vmatprep.subr.mxu0 0.0
    %134 = vmatpush1.msra.mxu0 %v97
    %135 = vmatprep.subr.mxu0 0.0
    %136 = vmatpush1.msra.mxu0 %v98
    %137 = vmatprep.subr.mxu0 0.0
    %138 = vmatpush1.msra.mxu0 %v99
    %139 = vmatprep.subr.mxu0 0.0
    %140 = vmatpush1.msra.mxu0 0.0
    %141 = vmatprep.subr.mxu0 0.0
    %142 = vmatpush1.msra.mxu0 0.0
    %143 = vmatprep.subr.mxu0 0.0
    %144 = vmatpush1.msra.mxu0 0.0
    %145 = vmatprep.subr.mxu0 0.0
    %146 = vmatpush1.msra.mxu0 0.0
    %147 = vmatprep.subr.mxu0 0.0
    %148 = vmatpush1.msra.mxu0 0.0
    %149 = vmatprep.subr.mxu0 0.0
    %150 = vmatpush1.msra.mxu0 0.0
    %151 = vmatprep.subr.mxu0 0.0
    %152 = vmatpush1.msra.mxu0 0.0
    %153 = vmatprep.subr.mxu0 0.0
    %154 = vmatpush1.msra.mxu0 0.0
    %155 = vmatprep.subr.mxu0 0.0
    %156 = vmatpush1.msra.mxu0 0.0
    %157 = vmatprep.subr.mxu0 0.0
    %158 = vmatpush1.msra.mxu0 0.0
    %159 = vmatprep.subr.mxu0 0.0
    %160 = vmatpush1.msra.mxu0 0.0
    %161 = vmatprep.subr.mxu0 0.0
    %162 = vmatpush1.msra.mxu0 0.0
    %163 = vmatprep.subr.mxu0 0.0
    %164 = vmatpush1.msra.mxu0 0.0
    %165 = vmatprep.subr.mxu0 0.0
    %166 = vmatpush1.msra.mxu0 0.0
    %167 = vmatprep.subr.mxu0 0.0
    %168 = vmatpush1.msra.mxu0 0.0
    %169 = vmatprep.subr.mxu0 0.0
    %170 = vmatpush1.msra.mxu0 0.0
    %171 = vmatprep.mubr.f32.mxu0 0.0
    %172 = vmatmul.mubr.f32.gmra.mrb[0].mxu0 %v82
    %v173 = vpop.f32.mrb[0].mxu0
    %v174 = vadd.f32 %v105, %v173
    %v175 = vpop.f32.mrb[0].mxu0
    %176 = vmatprep.mubr.f32.mxu0 0.0
    %177 = vmatmul.mubr.f32.gmra.mrb[0].mxu0 %v83
    %v178 = vpop.f32.mrb[0].mxu0
    %v179 = vadd.f32 %v105, %v178
    %v180 = vpop.f32.mrb[0].mxu0
    %181 = vdwg.mxu0
    %v182 = vmax.f32 %v174, 0.0
    %v183 = vmax.f32 %v179, 0.0
    %v184 = vld [vmem:[#allocation7] sm:$0xff]
    %v185 = vld [vmem:[#allocation7 + $0x8] sm:$0xff]
    %v186 = vld [vmem:[#allocation7 + $0x10] sm:$0xff]
    %v187 = vld [vmem:[#allocation7 + $0x18] sm:$0xff]
    %v188 = vld [vmem:[#allocation7 + $0x20] sm:$0xff]
    %v189 = vld [vmem:[#allocation7 + $0x28] sm:$0xff]
    %v190 = vld [vmem:[#allocation7 + $0x30] sm:$0xff]
    %v191 = vld [vmem:[#allocation7 + $0x38] sm:$0xff]
    %v192 = vld [vmem:[#allocation7 + $0x40] sm:$0xff]
    %v193 = vld [vmem:[#allocation7 + $0x48] sm:$0xff]
    %v194 = vld [vmem:[#allocation7 + $0x50] sm:$0xff]
    %v195 = vld [vmem:[#allocation7 + $0x58] sm:$0xff]
    %v196 = vld [vmem:[#allocation7 + $0x60] sm:$0xff]
    %v197 = vld [vmem:[#allocation7 + $0x68] sm:$0xff]
    %v198 = vld [vmem:[#allocation7 + $0x70] sm:$0xff]
    %v199 = vld [vmem:[#allocation7 + $0x78] sm:$0xff]
    %v200 = vld [vmem:[%s4] sm:$0x1]
    %v202 = vlaneseq
    %v203 = vshrl.u32 %v202, 7
    %v204 = vsub.s32 0, %v203
    %v205 = vrot.slane %v200, %v204
    %207 = vmatprep.subr.mxu0 0.0
    %208 = vmatpush1.msra.mxu0 %v184
    %209 = vmatprep.subr.mxu0 0.0
    %210 = vmatpush1.msra.mxu0 %v185
    %211 = vmatprep.subr.mxu0 0.0
    %212 = vmatpush1.msra.mxu0 %v186
    %213 = vmatprep.subr.mxu0 0.0
    %214 = vmatpush1.msra.mxu0 %v187
    %215 = vmatprep.subr.mxu0 0.0
    %216 = vmatpush1.msra.mxu0 %v188
    %217 = vmatprep.subr.mxu0 0.0
    %218 = vmatpush1.msra.mxu0 %v189
    %219 = vmatprep.subr.mxu0 0.0
    %220 = vmatpush1.msra.mxu0 %v190
    %221 = vmatprep.subr.mxu0 0.0
    %222 = vmatpush1.msra.mxu0 %v191
    %223 = vmatprep.subr.mxu0 0.0
    %224 = vmatpush1.msra.mxu0 %v192
    %225 = vmatprep.subr.mxu0 0.0
    %226 = vmatpush1.msra.mxu0 %v193
    %227 = vmatprep.subr.mxu0 0.0
    %228 = vmatpush1.msra.mxu0 %v194
    %229 = vmatprep.subr.mxu0 0.0
    %230 = vmatpush1.msra.mxu0 %v195
    %231 = vmatprep.subr.mxu0 0.0
    %232 = vmatpush1.msra.mxu0 %v196
    %233 = vmatprep.subr.mxu0 0.0
    %234 = vmatpush1.msra.mxu0 %v197
    %235 = vmatprep.subr.mxu0 0.0
    %236 = vmatpush1.msra.mxu0 %v198
    %237 = vmatprep.subr.mxu0 0.0
    %238 = vmatpush1.msra.mxu0 %v199
    %239 = vmatprep.subr.mxu0 0.0
    %240 = vmatpush1.msra.mxu0 0.0
    %241 = vmatprep.subr.mxu0 0.0
    %242 = vmatpush1.msra.mxu0 0.0
    %243 = vmatprep.subr.mxu0 0.0
    %244 = vmatpush1.msra.mxu0 0.0
    %245 = vmatprep.subr.mxu0 0.0
    %246 = vmatpush1.msra.mxu0 0.0
    %247 = vmatprep.subr.mxu0 0.0
    %248 = vmatpush1.msra.mxu0 0.0
    %249 = vmatprep.subr.mxu0 0.0
    %250 = vmatpush1.msra.mxu0 0.0
    %251 = vmatprep.subr.mxu0 0.0
    %252 = vmatpush1.msra.mxu0 0.0
    %253 = vmatprep.subr.mxu0 0.0
    %254 = vmatpush1.msra.mxu0 0.0
    %255 = vmatprep.subr.mxu0 0.0
    %256 = vmatpush1.msra.mxu0 0.0
    %257 = vmatprep.subr.mxu0 0.0
    %258 = vmatpush1.msra.mxu0 0.0
    %259 = vmatprep.subr.mxu0 0.0
    %260 = vmatpush1.msra.mxu0 0.0
    %261 = vmatprep.subr.mxu0 0.0
    %262 = vmatpush1.msra.mxu0 0.0
    %263 = vmatprep.subr.mxu0 0.0
    %264 = vmatpush1.msra.mxu0 0.0
    %265 = vmatprep.subr.mxu0 0.0
    %266 = vmatpush1.msra.mxu0 0.0
    %267 = vmatprep.subr.mxu0 0.0
    %268 = vmatpush1.msra.mxu0 0.0
    %269 = vmatprep.subr.mxu0 0.0
    %270 = vmatpush1.msra.mxu0 0.0
    %271 = vmatprep.mubr.f32.mxu0 0.0
    %272 = vmatmul.mubr.f32.gmra.mrb[0].mxu0 %v182
    %v273 = vpop.f32.mrb[0].mxu0
    %v274 = vadd.f32 %v205, %v273
    %v275 = vpop.f32.mrb[0].mxu0
    %276 = vmatprep.mubr.f32.mxu0 0.0
    %277 = vmatmul.mubr.f32.gmra.mrb[0].mxu0 %v183
    %v278 = vpop.f32.mrb[0].mxu0
    %v279 = vadd.f32 %v205, %v278
    %v280 = vpop.f32.mrb[0].mxu0
    %281 = vdwg.mxu0
    %v282 = vmax.f32 %v274, 0.0
    %v283 = vmax.f32 %v279, 0.0
    %v284 = vld [vmem:[#allocation8] sm:$0xff]
    %v285 = vld [vmem:[#allocation8 + $0x8] sm:$0xff]
    %v286 = vld [vmem:[#allocation8 + $0x10] sm:$0xff]
    %v287 = vld [vmem:[#allocation8 + $0x18] sm:$0xff]
    %v288 = vld [vmem:[#allocation8 + $0x20] sm:$0xff]
    %v289 = vld [vmem:[#allocation8 + $0x28] sm:$0xff]
    %v290 = vld [vmem:[#allocation8 + $0x30] sm:$0xff]
    %v291 = vld [vmem:[#allocation8 + $0x38] sm:$0xff]
    %v292 = vld [vmem:[#allocation8 + $0x40] sm:$0xff]
    %v293 = vld [vmem:[#allocation8 + $0x48] sm:$0xff]
    %v294 = vld [vmem:[#allocation8 + $0x50] sm:$0xff]
    %v295 = vld [vmem:[#allocation8 + $0x58] sm:$0xff]
    %v296 = vld [vmem:[#allocation8 + $0x60] sm:$0xff]
    %v297 = vld [vmem:[#allocation8 + $0x68] sm:$0xff]
    %v298 = vld [vmem:[#allocation8 + $0x70] sm:$0xff]
    %v299 = vld [vmem:[#allocation8 + $0x78] sm:$0xff]
    %v300 = vld [vmem:[%s6] sm:$0x1]
    %v302 = vlaneseq
    %v303 = vshrl.u32 %v302, 7
    %v304 = vsub.s32 0, %v303
    %v305 = vrot.slane %v300, %v304
    %307 = vmatprep.subr.mxu0 0.0
    %308 = vmatpush1.msra.mxu0 %v284
    %309 = vmatprep.subr.mxu0 0.0
    %310 = vmatpush1.msra.mxu0 %v285
    %311 = vmatprep.subr.mxu0 0.0
    %312 = vmatpush1.msra.mxu0 %v286
    %313 = vmatprep.subr.mxu0 0.0
    %314 = vmatpush1.msra.mxu0 %v287
    %315 = vmatprep.subr.mxu0 0.0
    %316 = vmatpush1.msra.mxu0 %v288
    %317 = vmatprep.subr.mxu0 0.0
    %318 = vmatpush1.msra.mxu0 %v289
    %319 = vmatprep.subr.mxu0 0.0
    %320 = vmatpush1.msra.mxu0 %v290
    %321 = vmatprep.subr.mxu0 0.0
    %322 = vmatpush1.msra.mxu0 %v291
    %323 = vmatprep.subr.mxu0 0.0
    %324 = vmatpush1.msra.mxu0 %v292
    %325 = vmatprep.subr.mxu0 0.0
    %326 = vmatpush1.msra.mxu0 %v293
    %327 = vmatprep.subr.mxu0 0.0
    %328 = vmatpush1.msra.mxu0 %v294
    %329 = vmatprep.subr.mxu0 0.0
    %330 = vmatpush1.msra.mxu0 %v295
    %331 = vmatprep.subr.mxu0 0.0
    %332 = vmatpush1.msra.mxu0 %v296
    %333 = vmatprep.subr.mxu0 0.0
    %334 = vmatpush1.msra.mxu0 %v297
    %335 = vmatprep.subr.mxu0 0.0
    %336 = vmatpush1.msra.mxu0 %v298
    %337 = vmatprep.subr.mxu0 0.0
    %338 = vmatpush1.msra.mxu0 %v299
    %339 = vmatprep.subr.mxu0 0.0
    %340 = vmatpush1.msra.mxu0 0.0
    %341 = vmatprep.subr.mxu0 0.0
    %342 = vmatpush1.msra.mxu0 0.0
    %343 = vmatprep.subr.mxu0 0.0
    %344 = vmatpush1.msra.mxu0 0.0
    %345 = vmatprep.subr.mxu0 0.0
    %346 = vmatpush1.msra.mxu0 0.0
    %347 = vmatprep.subr.mxu0 0.0
    %348 = vmatpush1.msra.mxu0 0.0
    %349 = vmatprep.subr.mxu0 0.0
    %350 = vmatpush1.msra.mxu0 0.0
    %351 = vmatprep.subr.mxu0 0.0
    %352 = vmatpush1.msra.mxu0 0.0
    %353 = vmatprep.subr.mxu0 0.0
    %354 = vmatpush1.msra.mxu0 0.0
    %355 = vmatprep.subr.mxu0 0.0
    %356 = vmatpush1.msra.mxu0 0.0
    %357 = vmatprep.subr.mxu0 0.0
    %358 = vmatpush1.msra.mxu0 0.0
    %359 = vmatprep.subr.mxu0 0.0
    %360 = vmatpush1.msra.mxu0 0.0
    %361 = vmatprep.subr.mxu0 0.0
    %362 = vmatpush1.msra.mxu0 0.0
    %363 = vmatprep.subr.mxu0 0.0
    %364 = vmatpush1.msra.mxu0 0.0
    %365 = vmatprep.subr.mxu0 0.0
    %366 = vmatpush1.msra.mxu0 0.0
    %367 = vmatprep.subr.mxu0 0.0
    %368 = vmatpush1.msra.mxu0 0.0
    %369 = vmatprep.subr.mxu0 0.0
    %370 = vmatpush1.msra.mxu0 0.0
    %371 = vmatprep.mubr.f32.mxu0 0.0
    %372 = vmatmul.mubr.f32.gmra.mrb[0].mxu0 %v282
    %v373 = vpop.f32.mrb[0].mxu0
    %v374 = vadd.f32 %v305, %v373
    %v375 = vpop.f32.mrb[0].mxu0
    %376 = vmatprep.mubr.f32.mxu0 0.0
    %377 = vmatmul.mubr.f32.gmra.mrb[0].mxu0 %v283
    %v378 = vpop.f32.mrb[0].mxu0
    %v379 = vadd.f32 %v305, %v378
    %v380 = vpop.f32.mrb[0].mxu0
    %381 = vdwg.mxu0
    %382 = vst [vmem:[#allocation10] sm:$0xff] %v374
    %383 = vst [vmem:[#allocation10 + $0x8] sm:$0xff] %v379
    // Predicated region
    $region46: #{tpu_custom_call.1} parent=1 // pred_check
      _
    $region47: #{tpu_custom_call.1} parent=1 // pred_check_branch
      %385 = sbr.rel (0) target = $region49
    $region48: #{tpu_custom_call.1} parent=1 // pred_region
      %s387 = ssub.s32 256, 256
      %388 = vsyncadd [#allocation4], %s387
      %s389 = sshll.u32 [#allocation10], 4
      %s390 = int_to_ptr.vmem [resolvable:$true] %s389
      %395 = dma.vmem_to_hbm [thread:$0]  %s390, 256, %s7, [#allocation4], 128, 128, 8
    $region49: #{tpu_custom_call.1} parent=1 // pred_fallthru
      _
    // Predicated region
    $region50: #{tpu_custom_call.1} parent=1 // pred_check
      _
    $region51: #{tpu_custom_call.1} parent=1 // pred_check_branch
      %397 = sbr.rel (0) target = $region53
    $region52: #{tpu_custom_call.1} parent=1 // pred_region
      %398 = dma.done [#allocation4], 256
    $region53: #{tpu_custom_call.1} parent=1 // pred_fallthru
      _
    %399 = vsyncpa [#allocation3], 1
    %400 = vsyncpa [#allocation6], 1
    %401 = vsyncpa [#allocation9], 1
    %402 = vsyncpa [#allocation4], 1

// kernel: tpu_custom_call.1
$region0: #{tpu_custom_call.1}
  #allocation0 [shape = 'u32[]', space=smem, size = 0x4, offset = 0x4, fixed_abs, tag = 'smem constant byte address 0x4 - core index']
  #allocation1 [shape = 'u32[144,128]{1,0:T(1,128)}', space=vmem, size = 0x12000, scoped, tag = 'internal scratch']
  %s0 = inlined_call_operand.hbm [shape: f32[16,128], index: 0, kind: input, shape index: {}]
  %s1 = inlined_call_operand.hbm [shape: f32[128,128], index: 1, kind: input, shape index: {}]
  %s2 = inlined_call_operand.vmem [shape: f32[1,128], index: 2, kind: input, shape index: {}]
  %s3 = inlined_call_operand.hbm [shape: f32[128,128], index: 3, kind: input, shape index: {}]
  %s4 = inlined_call_operand.vmem [shape: f32[1,128], index: 4, kind: input, shape index: {}]
  %s5 = inlined_call_operand.hbm [shape: f32[128,128], index: 5, kind: input, shape index: {}]
  %s6 = inlined_call_operand.vmem [shape: f32[1,128], index: 6, kind: input, shape index: {}]
  %s7 = inlined_call_operand.hbm [shape: f32[16,128], index: 7, kind: output, shape index: {}]
  %s8 = sld [smem:[#allocation0]]
  $region54: #{tpu_custom_call.1} parent=0
    _
  %s10 = ssub.s32 1, %s8
  %s11 = scalar_select 0, %s10, %s8
  $region1: #{tpu_custom_call.1} parent=0
    #allocation2 [shape = 'u8[8192]{0}', space=vmem, size = 0x2000, scoped, tag = 'input window, operand 0, single buffered']
    #allocation3 [shape = 's32[1]{0}', space=sflag, size = 0x4, scoped, tag = 'scoped memory for tpu_custom_call.1']
    #allocation4 [shape = 's32[1]{0}', space=sflag, size = 0x4, scoped, tag = 'scoped memory for tpu_custom_call.1']
    #allocation5 [shape = 'u8[65536]{0}', space=vmem, size = 0x10000, scoped, tag = 'input window, operand 1, single buffered']
    #allocation6 [shape = 's32[1]{0}', space=sflag, size = 0x4, scoped, tag = 'scoped memory for tpu_custom_call.1']
    #allocation7 [shape = 'u8[65536]{0}', space=vmem, size = 0x10000, scoped, tag = 'input window, operand 3, single buffered']
    #allocation8 [shape = 'u8[65536]{0}', space=vmem, size = 0x10000, scoped, tag = 'input window, operand 5, single buffered']
    #allocation9 [shape = 's32[1]{0}', space=sflag, size = 0x4, scoped, tag = 'scoped memory for tpu_custom_call.1']
    #allocation10 [shape = 'u8[8192]{0}', space=vmem, size = 0x2000, scoped, tag = 'output window, operand 0, single buffered']
    %12 = vsyncpa [#allocation3], 0
    %13 = vsyncpa [#allocation6], 0
    %14 = vsyncpa [#allocation9], 0
    %15 = vsyncpa [#allocation4], 0
    // Predicated region
    $region2: #{tpu_custom_call.1} parent=1 // pred_check
      _
    $region3: #{tpu_custom_call.1} parent=1 // pred_check_branch
      %17 = sbr.rel (0) target = $region5
    $region4: #{tpu_custom_call.1} parent=1 // pred_region
      %s19 = ssub.s32 256, 256
      %20 = vsyncadd [#allocation3], %s19
      %s21 = sshll.u32 [#allocation2], 4
      %s22 = int_to_ptr.vmem [resolvable:$true] %s21
      %27 = dma.hbm_to_vmem [thread:$0]  %s0, 256, %s22, [#allocation3], 128, 128, 8
    $region5: #{tpu_custom_call.1} parent=1 // pred_fallthru
      _
    // Predicated region
    $region6: #{tpu_custom_call.1} parent=1 // pred_check
      _
    $region7: #{tpu_custom_call.1} parent=1 // pred_check_branch
      %29 = sbr.rel (0) target = $region9
    $region8: #{tpu_custom_call.1} parent=1 // pred_region
      %s31 = ssub.s32 2048, 2048
      %32 = vsyncadd [#allocation6], %s31
      %s33 = sshll.u32 [#allocation5], 4
      %s34 = int_to_ptr.vmem [resolvable:$true] %s33
      %39 = dma.hbm_to_vmem [thread:$0]  %s1, 2048, %s34, [#allocation6], 128, 128, 8
    $region9: #{tpu_custom_call.1} parent=1 // pred_fallthru
      _
    // Predicated region
    $region10: #{tpu_custom_call.1} parent=1 // pred_check
      _
    $region11: #{tpu_custom_call.1} parent=1 // pred_check_branch
      %41 = sbr.rel (0) target = $region13
    $region12: #{tpu_custom_call.1} parent=1 // pred_region
      _
    $region13: #{tpu_custom_call.1} parent=1 // pred_fallthru
      _
    // Predicated region
    $region14: #{tpu_custom_call.1} parent=1 // pred_check
      _
    $region15: #{tpu_custom_call.1} parent=1 // pred_check_branch
      %43 = sbr.rel (0) target = $region17
    $region16: #{tpu_custom_call.1} parent=1 // pred_region
      %s45 = ssub.s32 2048, 2048
      %46 = vsyncadd [#allocation6], %s45
      %s47 = sshll.u32 [#allocation7], 4
      %s48 = int_to_ptr.vmem [resolvable:$true] %s47
      %53 = dma.hbm_to_vmem [thread:$0]  %s3, 2048, %s48, [#allocation6], 128, 128, 8
    $region17: #{tpu_custom_call.1} parent=1 // pred_fallthru
      _
    // Predicated region
    $region18: #{tpu_custom_call.1} parent=1 // pred_check
      _
    $region19: #{tpu_custom_call.1} parent=1 // pred_check_branch
      %55 = sbr.rel (0) target = $region21
    $region20: #{tpu_custom_call.1} parent=1 // pred_region
      _
    $region21: #{tpu_custom_call.1} parent=1 // pred_fallthru
      _
    // Predicated region
    $region22: #{tpu_custom_call.1} parent=1 // pred_check
      _
    $region23: #{tpu_custom_call.1} parent=1 // pred_check_branch
      %57 = sbr.rel (0) target = $region25
    $region24: #{tpu_custom_call.1} parent=1 // pred_region
      %s59 = ssub.s32 2048, 2048
      %60 = vsyncadd [#allocation9], %s59
      %s61 = sshll.u32 [#allocation8], 4
      %s62 = int_to_ptr.vmem [resolvable:$true] %s61
      %67 = dma.hbm_to_vmem [thread:$0]  %s5, 2048, %s62, [#allocation9], 128, 128, 8
    $region25: #{tpu_custom_call.1} parent=1 // pred_fallthru
      _
    // Predicated region
    $region26: #{tpu_custom_call.1} parent=1 // pred_check
      _
    $region27: #{tpu_custom_call.1} parent=1 // pred_check_branch
      %69 = sbr.rel (0) target = $region29
    $region28: #{tpu_custom_call.1} parent=1 // pred_region
      _
    $region29: #{tpu_custom_call.1} parent=1 // pred_fallthru
      _
    // Predicated region
    $region30: #{tpu_custom_call.1} parent=1 // pred_check
      _
    $region31: #{tpu_custom_call.1} parent=1 // pred_check_branch
      %71 = sbr.rel (0) target = $region33
    $region32: #{tpu_custom_call.1} parent=1 // pred_region
      %72 = dma.done [#allocation3], 256
    $region33: #{tpu_custom_call.1} parent=1 // pred_fallthru
      _
    // Predicated region
    $region34: #{tpu_custom_call.1} parent=1 // pred_check
      _
    $region35: #{tpu_custom_call.1} parent=1 // pred_check_branch
      %74 = sbr.rel (0) target = $region37
    $region36: #{tpu_custom_call.1} parent=1 // pred_region
      %75 = dma.done [#allocation6], 2048
    $region37: #{tpu_custom_call.1} parent=1 // pred_fallthru
      _
    // Predicated region
    $region38: #{tpu_custom_call.1} parent=1 // pred_check
      _
    $region39: #{tpu_custom_call.1} parent=1 // pred_check_branch
      %77 = sbr.rel (0) target = $region41
    $region40: #{tpu_custom_call.1} parent=1 // pred_region
      %78 = dma.done [#allocation6], 2048
    $region41: #{tpu_custom_call.1} parent=1 // pred_fallthru
      _
    // Predicated region
    $region42: #{tpu_custom_call.1} parent=1 // pred_check
      _
    $region43: #{tpu_custom_call.1} parent=1 // pred_check_branch
      %80 = sbr.rel (0) target = $region45
    $region44: #{tpu_custom_call.1} parent=1 // pred_region
      %81 = dma.done [#allocation9], 2048
    $region45: #{tpu_custom_call.1} parent=1 // pred_fallthru
      _
    %v82 = vld [vmem:[#allocation2] sm:$0xff]
    %v83 = vld [vmem:[#allocation2 + $0x8] sm:$0xff]
    %v84 = vld [vmem:[#allocation5] sm:$0xff]
    %v85 = vld [vmem:[#allocation5 + $0x8] sm:$0xff]
    %v86 = vld [vmem:[#allocation5 + $0x10] sm:$0xff]
    %v87 = vld [vmem:[#allocation5 + $0x18] sm:$0xff]
    %v88 = vld [vmem:[#allocation5 + $0x20] sm:$0xff]
    %v89 = vld [vmem:[#allocation5 + $0x28] sm:$0xff]
    %v90 = vld [vmem:[#allocation5 + $0x30] sm:$0xff]
    %v91 = vld [vmem:[#allocation5 + $0x38] sm:$0xff]
    %v92 = vld [vmem:[#allocation5 + $0x40] sm:$0xff]
    %v93 = vld [vmem:[#allocation5 + $0x48] sm:$0xff]
    %v94 = vld [vmem:[#allocation5 + $0x50] sm:$0xff]
    %v95 = vld [vmem:[#allocation5 + $0x58] sm:$0xff]
    %v96 = vld [vmem:[#allocation5 + $0x60] sm:$0xff]
    %v97 = vld [vmem:[#allocation5 + $0x68] sm:$0xff]
    %v98 = vld [vmem:[#allocation5 + $0x70] sm:$0xff]
    %v99 = vld [vmem:[#allocation5 + $0x78] sm:$0xff]
    %v100 = vld [vmem:[%s2] sm:$0x1]
    %v102 = vlaneseq
    %v103 = vshrl.u32 %v102, 7
    %v104 = vsub.s32 0, %v103
    %v105 = vrot.slane %v100, %v104
    %107 = vmatprep.subr.mxu0 0.0
    %108 = vmatpush1.msra.mxu0 %v84
    %109 = vmatprep.subr.mxu0 0.0
    %110 = vmatpush1.msra.mxu0 %v85
    %111 = vmatprep.subr.mxu0 0.0
    %112 = vmatpush1.msra.mxu0 %v86
    %113 = vmatprep.subr.mxu0 0.0
    %114 = vmatpush1.msra.mxu0 %v87
    %115 = vmatprep.subr.mxu0 0.0
    %116 = vmatpush1.msra.mxu0 %v88
    %117 = vmatprep.subr.mxu0 0.0
    %118 = vmatpush1.msra.mxu0 %v89
    %119 = vmatprep.subr.mxu0 0.0
    %120 = vmatpush1.msra.mxu0 %v90
    %121 = vmatprep.subr.mxu0 0.0
    %122 = vmatpush1.msra.mxu0 %v91
    %123 = vmatprep.subr.mxu0 0.0
    %124 = vmatpush1.msra.mxu0 %v92
    %125 = vmatprep.subr.mxu0 0.0
    %126 = vmatpush1.msra.mxu0 %v93
    %127 = vmatprep.subr.mxu0 0.0
    %128 = vmatpush1.msra.mxu0 %v94
    %129 = vmatprep.subr.mxu0 0.0
    %130 = vmatpush1.msra.mxu0 %v95
    %131 = vmatprep.subr.mxu0 0.0
    %132 = vmatpush1.msra.mxu0 %v96
    %133 = vmatprep.subr.mxu0 0.0
    %134 = vmatpush1.msra.mxu0 %v97
    %135 = vmatprep.subr.mxu0 0.0
    %136 = vmatpush1.msra.mxu0 %v98
    %137 = vmatprep.subr.mxu0 0.0
    %138 = vmatpush1.msra.mxu0 %v99
    %139 = vmatprep.subr.mxu0 0.0
    %140 = vmatpush1.msra.mxu0 0.0
    %141 = vmatprep.subr.mxu0 0.0
    %142 = vmatpush1.msra.mxu0 0.0
    %143 = vmatprep.subr.mxu0 0.0
    %144 = vmatpush1.msra.mxu0 0.0
    %145 = vmatprep.subr.mxu0 0.0
    %146 = vmatpush1.msra.mxu0 0.0
    %147 = vmatprep.subr.mxu0 0.0
    %148 = vmatpush1.msra.mxu0 0.0
    %149 = vmatprep.subr.mxu0 0.0
    %150 = vmatpush1.msra.mxu0 0.0
    %151 = vmatprep.subr.mxu0 0.0
    %152 = vmatpush1.msra.mxu0 0.0
    %153 = vmatprep.subr.mxu0 0.0
    %154 = vmatpush1.msra.mxu0 0.0
    %155 = vmatprep.subr.mxu0 0.0
    %156 = vmatpush1.msra.mxu0 0.0
    %157 = vmatprep.subr.mxu0 0.0
    %158 = vmatpush1.msra.mxu0 0.0
    %159 = vmatprep.subr.mxu0 0.0
    %160 = vmatpush1.msra.mxu0 0.0
    %161 = vmatprep.subr.mxu0 0.0
    %162 = vmatpush1.msra.mxu0 0.0
    %163 = vmatprep.subr.mxu0 0.0
    %164 = vmatpush1.msra.mxu0 0.0
    %165 = vmatprep.subr.mxu0 0.0
    %166 = vmatpush1.msra.mxu0 0.0
    %167 = vmatprep.subr.mxu0 0.0
    %168 = vmatpush1.msra.mxu0 0.0
    %169 = vmatprep.subr.mxu0 0.0
    %170 = vmatpush1.msra.mxu0 0.0
    %171 = vmatprep.mubr.f32.mxu0 0.0
    %172 = vmatmul.mubr.f32.gmra.mrb[0].mxu0 %v82
    %v173 = vpop.f32.mrb[0].mxu0
    %v174 = vadd.f32 %v105, %v173
    %v175 = vpop.f32.mrb[0].mxu0
    %176 = vmatprep.mubr.f32.mxu0 0.0
    %177 = vmatmul.mubr.f32.gmra.mrb[0].mxu0 %v83
    %v178 = vpop.f32.mrb[0].mxu0
    %v179 = vadd.f32 %v105, %v178
    %v180 = vpop.f32.mrb[0].mxu0
    %181 = vdwg.mxu0
    %v182 = vmax.f32 %v174, 0.0
    %v183 = vmax.f32 %v179, 0.0
    %v184 = vld [vmem:[#allocation7] sm:$0xff]
    %v185 = vld [vmem:[#allocation7 + $0x8] sm:$0xff]
    %v186 = vld [vmem:[#allocation7 + $0x10] sm:$0xff]
    %v187 = vld [vmem:[#allocation7 + $0x18] sm:$0xff]
    %v188 = vld [vmem:[#allocation7 + $0x20] sm:$0xff]
    %v189 = vld [vmem:[#allocation7 + $0x28] sm:$0xff]
    %v190 = vld [vmem:[#allocation7 + $0x30] sm:$0xff]
    %v191 = vld [vmem:[#allocation7 + $0x38] sm:$0xff]
    %v192 = vld [vmem:[#allocation7 + $0x40] sm:$0xff]
    %v193 = vld [vmem:[#allocation7 + $0x48] sm:$0xff]
    %v194 = vld [vmem:[#allocation7 + $0x50] sm:$0xff]
    %v195 = vld [vmem:[#allocation7 + $0x58] sm:$0xff]
    %v196 = vld [vmem:[#allocation7 + $0x60] sm:$0xff]
    %v197 = vld [vmem:[#allocation7 + $0x68] sm:$0xff]
    %v198 = vld [vmem:[#allocation7 + $0x70] sm:$0xff]
    %v199 = vld [vmem:[#allocation7 + $0x78] sm:$0xff]
    %v200 = vld [vmem:[%s4] sm:$0x1]
    %v202 = vlaneseq
    %v203 = vshrl.u32 %v202, 7
    %v204 = vsub.s32 0, %v203
    %v205 = vrot.slane %v200, %v204
    %207 = vmatprep.subr.mxu0 0.0
    %208 = vmatpush1.msra.mxu0 %v184
    %209 = vmatprep.subr.mxu0 0.0
    %210 = vmatpush1.msra.mxu0 %v185
    %211 = vmatprep.subr.mxu0 0.0
    %212 = vmatpush1.msra.mxu0 %v186
    %213 = vmatprep.subr.mxu0 0.0
    %214 = vmatpush1.msra.mxu0 %v187
    %215 = vmatprep.subr.mxu0 0.0
    %216 = vmatpush1.msra.mxu0 %v188
    %217 = vmatprep.subr.mxu0 0.0
    %218 = vmatpush1.msra.mxu0 %v189
    %219 = vmatprep.subr.mxu0 0.0
    %220 = vmatpush1.msra.mxu0 %v190
    %221 = vmatprep.subr.mxu0 0.0
    %222 = vmatpush1.msra.mxu0 %v191
    %223 = vmatprep.subr.mxu0 0.0
    %224 = vmatpush1.msra.mxu0 %v192
    %225 = vmatprep.subr.mxu0 0.0
    %226 = vmatpush1.msra.mxu0 %v193
    %227 = vmatprep.subr.mxu0 0.0
    %228 = vmatpush1.msra.mxu0 %v194
    %229 = vmatprep.subr.mxu0 0.0
    %230 = vmatpush1.msra.mxu0 %v195
    %231 = vmatprep.subr.mxu0 0.0
    %232 = vmatpush1.msra.mxu0 %v196
    %233 = vmatprep.subr.mxu0 0.0
    %234 = vmatpush1.msra.mxu0 %v197
    %235 = vmatprep.subr.mxu0 0.0
    %236 = vmatpush1.msra.mxu0 %v198
    %237 = vmatprep.subr.mxu0 0.0
    %238 = vmatpush1.msra.mxu0 %v199
    %239 = vmatprep.subr.mxu0 0.0
    %240 = vmatpush1.msra.mxu0 0.0
    %241 = vmatprep.subr.mxu0 0.0
    %242 = vmatpush1.msra.mxu0 0.0
    %243 = vmatprep.subr.mxu0 0.0
    %244 = vmatpush1.msra.mxu0 0.0
    %245 = vmatprep.subr.mxu0 0.0
    %246 = vmatpush1.msra.mxu0 0.0
    %247 = vmatprep.subr.mxu0 0.0
    %248 = vmatpush1.msra.mxu0 0.0
    %249 = vmatprep.subr.mxu0 0.0
    %250 = vmatpush1.msra.mxu0 0.0
    %251 = vmatprep.subr.mxu0 0.0
    %252 = vmatpush1.msra.mxu0 0.0
    %253 = vmatprep.subr.mxu0 0.0
    %254 = vmatpush1.msra.mxu0 0.0
    %255 = vmatprep.subr.mxu0 0.0
    %256 = vmatpush1.msra.mxu0 0.0
    %257 = vmatprep.subr.mxu0 0.0
    %258 = vmatpush1.msra.mxu0 0.0
    %259 = vmatprep.subr.mxu0 0.0
    %260 = vmatpush1.msra.mxu0 0.0
    %261 = vmatprep.subr.mxu0 0.0
    %262 = vmatpush1.msra.mxu0 0.0
    %263 = vmatprep.subr.mxu0 0.0
    %264 = vmatpush1.msra.mxu0 0.0
    %265 = vmatprep.subr.mxu0 0.0
    %266 = vmatpush1.msra.mxu0 0.0
    %267 = vmatprep.subr.mxu0 0.0
    %268 = vmatpush1.msra.mxu0 0.0
    %269 = vmatprep.subr.mxu0 0.0
    %270 = vmatpush1.msra.mxu0 0.0
    %271 = vmatprep.mubr.f32.mxu0 0.0
    %272 = vmatmul.mubr.f32.gmra.mrb[0].mxu0 %v182
    %v273 = vpop.f32.mrb[0].mxu0
    %v274 = vadd.f32 %v205, %v273
    %v275 = vpop.f32.mrb[0].mxu0
    %276 = vmatprep.mubr.f32.mxu0 0.0
    %277 = vmatmul.mubr.f32.gmra.mrb[0].mxu0 %v183
    %v278 = vpop.f32.mrb[0].mxu0
    %v279 = vadd.f32 %v205, %v278
    %v280 = vpop.f32.mrb[0].mxu0
    %281 = vdwg.mxu0
    %v282 = vmax.f32 %v274, 0.0
    %v283 = vmax.f32 %v279, 0.0
    %v284 = vld [vmem:[#allocation8] sm:$0xff]
    %v285 = vld [vmem:[#allocation8 + $0x8] sm:$0xff]
    %v286 = vld [vmem:[#allocation8 + $0x10] sm:$0xff]
    %v287 = vld [vmem:[#allocation8 + $0x18] sm:$0xff]
    %v288 = vld [vmem:[#allocation8 + $0x20] sm:$0xff]
    %v289 = vld [vmem:[#allocation8 + $0x28] sm:$0xff]
    %v290 = vld [vmem:[#allocation8 + $0x30] sm:$0xff]
    %v291 = vld [vmem:[#allocation8 + $0x38] sm:$0xff]
    %v292 = vld [vmem:[#allocation8 + $0x40] sm:$0xff]
    %v293 = vld [vmem:[#allocation8 + $0x48] sm:$0xff]
    %v294 = vld [vmem:[#allocation8 + $0x50] sm:$0xff]
    %v295 = vld [vmem:[#allocation8 + $0x58] sm:$0xff]
    %v296 = vld [vmem:[#allocation8 + $0x60] sm:$0xff]
    %v297 = vld [vmem:[#allocation8 + $0x68] sm:$0xff]
    %v298 = vld [vmem:[#allocation8 + $0x70] sm:$0xff]
    %v299 = vld [vmem:[#allocation8 + $0x78] sm:$0xff]
    %v300 = vld [vmem:[%s6] sm:$0x1]
    %v302 = vlaneseq
    %v303 = vshrl.u32 %v302, 7
    %v304 = vsub.s32 0, %v303
    %v305 = vrot.slane %v300, %v304
    %307 = vmatprep.subr.mxu0 0.0
    %308 = vmatpush1.msra.mxu0 %v284
    %309 = vmatprep.subr.mxu0 0.0
    %310 = vmatpush1.msra.mxu0 %v285
    %311 = vmatprep.subr.mxu0 0.0
    %312 = vmatpush1.msra.mxu0 %v286
    %313 = vmatprep.subr.mxu0 0.0
    %314 = vmatpush1.msra.mxu0 %v287
    %315 = vmatprep.subr.mxu0 0.0
    %316 = vmatpush1.msra.mxu0 %v288
    %317 = vmatprep.subr.mxu0 0.0
    %318 = vmatpush1.msra.mxu0 %v289
    %319 = vmatprep.subr.mxu0 0.0
    %320 = vmatpush1.msra.mxu0 %v290
    %321 = vmatprep.subr.mxu0 0.0
    %322 = vmatpush1.msra.mxu0 %v291
    %323 = vmatprep.subr.mxu0 0.0
    %324 = vmatpush1.msra.mxu0 %v292
    %325 = vmatprep.subr.mxu0 0.0
    %326 = vmatpush1.msra.mxu0 %v293
    %327 = vmatprep.subr.mxu0 0.0
    %328 = vmatpush1.msra.mxu0 %v294
    %329 = vmatprep.subr.mxu0 0.0
    %330 = vmatpush1.msra.mxu0 %v295
    %331 = vmatprep.subr.mxu0 0.0
    %332 = vmatpush1.msra.mxu0 %v296
    %333 = vmatprep.subr.mxu0 0.0
    %334 = vmatpush1.msra.mxu0 %v297
    %335 = vmatprep.subr.mxu0 0.0
    %336 = vmatpush1.msra.mxu0 %v298
    %337 = vmatprep.subr.mxu0 0.0
    %338 = vmatpush1.msra.mxu0 %v299
    %339 = vmatprep.subr.mxu0 0.0
    %340 = vmatpush1.msra.mxu0 0.0
    %341 = vmatprep.subr.mxu0 0.0
    %342 = vmatpush1.msra.mxu0 0.0
    %343 = vmatprep.subr.mxu0 0.0
    %344 = vmatpush1.msra.mxu0 0.0
    %345 = vmatprep.subr.mxu0 0.0
    %346 = vmatpush1.msra.mxu0 0.0
    %347 = vmatprep.subr.mxu0 0.0
    %348 = vmatpush1.msra.mxu0 0.0
    %349 = vmatprep.subr.mxu0 0.0
    %350 = vmatpush1.msra.mxu0 0.0
    %351 = vmatprep.subr.mxu0 0.0
    %352 = vmatpush1.msra.mxu0 0.0
    %353 = vmatprep.subr.mxu0 0.0
    %354 = vmatpush1.msra.mxu0 0.0
    %355 = vmatprep.subr.mxu0 0.0
    %356 = vmatpush1.msra.mxu0 0.0
    %357 = vmatprep.subr.mxu0 0.0
    %358 = vmatpush1.msra.mxu0 0.0
    %359 = vmatprep.subr.mxu0 0.0
    %360 = vmatpush1.msra.mxu0 0.0
    %361 = vmatprep.subr.mxu0 0.0
    %362 = vmatpush1.msra.mxu0 0.0
    %363 = vmatprep.subr.mxu0 0.0
    %364 = vmatpush1.msra.mxu0 0.0
    %365 = vmatprep.subr.mxu0 0.0
    %366 = vmatpush1.msra.mxu0 0.0
    %367 = vmatprep.subr.mxu0 0.0
    %368 = vmatpush1.msra.mxu0 0.0
    %369 = vmatprep.subr.mxu0 0.0
    %370 = vmatpush1.msra.mxu0 0.0
    %371 = vmatprep.mubr.f32.mxu0 0.0
    %372 = vmatmul.mubr.f32.gmra.mrb[0].mxu0 %v282
    %v373 = vpop.f32.mrb[0].mxu0
    %v374 = vadd.f32 %v305, %v373
    %v375 = vpop.f32.mrb[0].mxu0
    %376 = vmatprep.mubr.f32.mxu0 0.0
    %377 = vmatmul.mubr.f32.gmra.mrb[0].mxu0 %v283
    %v378 = vpop.f32.mrb[0].mxu0
    %v379 = vadd.f32 %v305, %v378
    %v380 = vpop.f32.mrb[0].mxu0
    %381 = vdwg.mxu0
    %382 = vst [vmem:[#allocation10] sm:$0xff] %v374
    %383 = vst [vmem:[#allocation10 + $0x8] sm:$0xff] %v379
    // Predicated region
    $region46: #{tpu_custom_call.1} parent=1 // pred_check
      _
    $region47: #{tpu_custom_call.1} parent=1 // pred_check_branch
      %385 = sbr.rel (0) target = $region49
    $region48: #{tpu_custom_call.1} parent=1 // pred_region
      %s387 = ssub.s32 256, 256
      %388 = vsyncadd [#allocation4], %s387
      %s389 = sshll.u32 [#allocation10], 4
      %s390 = int_to_ptr.vmem [resolvable:$true] %s389
      %395 = dma.vmem_to_hbm [thread:$0]  %s390, 256, %s7, [#allocation4], 128, 128, 8
    $region49: #{tpu_custom_call.1} parent=1 // pred_fallthru
      _
    // Predicated region
    $region50: #{tpu_custom_call.1} parent=1 // pred_check
      _
    $region51: #{tpu_custom_call.1} parent=1 // pred_check_branch
      %397 = sbr.rel (0) target = $region53
    $region52: #{tpu_custom_call.1} parent=1 // pred_region
      %398 = dma.done [#allocation4], 256
    $region53: #{tpu_custom_call.1} parent=1 // pred_fallthru
      _
    %399 = vsyncpa [#allocation3], 1
    %400 = vsyncpa [#allocation6], 1
    %401 = vsyncpa [#allocation9], 1
    %402 = vsyncpa [#allocation4], 1

// kernel: tpu_custom_call.1
$region0: #{tpu_custom_call.1}
  #allocation0 [shape = 'u32[]', space=smem, size = 0x4, offset = 0x4, fixed_abs, tag = 'smem constant byte address 0x4 - core index']
  #allocation1 [shape = 'u32[144,128]{1,0:T(1,128)}', space=vmem, size = 0x12000, scoped, tag = 'internal scratch']
  #allocation2 [shape = 'f32[16,128]{1,0:T(8,128)}', space=vmem, size = 0x2000, scoped, tag = 'scratch operand']
  %s0 = inlined_call_operand.hbm [shape: f32[16,128], index: 0, kind: input, shape index: {}]
  %s1 = inlined_call_operand.hbm [shape: f32[128,128], index: 1, kind: input, shape index: {}]
  %s2 = inlined_call_operand.vmem [shape: f32[1,128], index: 2, kind: input, shape index: {}]
  %s3 = inlined_call_operand.hbm [shape: f32[16,128], index: 3, kind: output, shape index: {}]
  %s4 = sld [smem:[#allocation0]]
  $region38: #{tpu_custom_call.1} parent=0
    _
  %s6 = ssub.s32 1, %s4
  %s7 = scalar_select 0, %s6, %s4
  $region1: #{tpu_custom_call.1} parent=0
    #allocation3 [shape = 'u8[8192]{0}', space=vmem, size = 0x2000, scoped, tag = 'input window, operand 0, single buffered']
    #allocation4 [shape = 's32[1]{0}', space=sflag, size = 0x4, scoped, tag = 'scoped memory for tpu_custom_call.1']
    #allocation5 [shape = 's32[1]{0}', space=sflag, size = 0x4, scoped, tag = 'scoped memory for tpu_custom_call.1']
    #allocation6 [shape = 'u8[65536]{0}', space=vmem, size = 0x10000, scoped, tag = 'input window, operand 1, single buffered']
    #allocation7 [shape = 's32[1]{0}', space=sflag, size = 0x4, scoped, tag = 'scoped memory for tpu_custom_call.1']
    #allocation8 [shape = 'u8[8192]{0}', space=vmem, size = 0x2000, scoped, tag = 'output window, operand 0, single buffered']
    %8 = vsyncpa [#allocation4], 0
    %9 = vsyncpa [#allocation7], 0
    %10 = vsyncpa [#allocation5], 0
    // Predicated region
    $region2: #{tpu_custom_call.1} parent=1 // pred_check
      _
    $region3: #{tpu_custom_call.1} parent=1 // pred_check_branch
      %12 = sbr.rel (0) target = $region5
    $region4: #{tpu_custom_call.1} parent=1 // pred_region
      %s14 = ssub.s32 256, 256
      %15 = vsyncadd [#allocation4], %s14
      %s16 = sshll.u32 [#allocation3], 4
      %s17 = int_to_ptr.vmem [resolvable:$true] %s16
      %22 = dma.hbm_to_vmem [thread:$0]  %s0, 256, %s17, [#allocation4], 128, 128, 8
    $region5: #{tpu_custom_call.1} parent=1 // pred_fallthru
      _
    // Predicated region
    $region6: #{tpu_custom_call.1} parent=1 // pred_check
      _
    $region7: #{tpu_custom_call.1} parent=1 // pred_check_branch
      %24 = sbr.rel (0) target = $region9
    $region8: #{tpu_custom_call.1} parent=1 // pred_region
      %s26 = ssub.s32 2048, 2048
      %27 = vsyncadd [#allocation7], %s26
      %s28 = sshll.u32 [#allocation6], 4
      %s29 = int_to_ptr.vmem [resolvable:$true] %s28
      %34 = dma.hbm_to_vmem [thread:$0]  %s1, 2048, %s29, [#allocation7], 128, 128, 8
    $region9: #{tpu_custom_call.1} parent=1 // pred_fallthru
      _
    // Predicated region
    $region10: #{tpu_custom_call.1} parent=1 // pred_check
      _
    $region11: #{tpu_custom_call.1} parent=1 // pred_check_branch
      %36 = sbr.rel (0) target = $region13
    $region12: #{tpu_custom_call.1} parent=1 // pred_region
      _
    $region13: #{tpu_custom_call.1} parent=1 // pred_fallthru
      _
    // Predicated region
    $region14: #{tpu_custom_call.1} parent=1 // pred_check
      _
    $region15: #{tpu_custom_call.1} parent=1 // pred_check_branch
      %38 = sbr.rel (0) target = $region17
    $region16: #{tpu_custom_call.1} parent=1 // pred_region
      %39 = dma.done [#allocation4], 256
    $region17: #{tpu_custom_call.1} parent=1 // pred_fallthru
      _
    // Predicated region
    $region18: #{tpu_custom_call.1} parent=1 // pred_check
      _
    $region19: #{tpu_custom_call.1} parent=1 // pred_check_branch
      %41 = sbr.rel (0) target = $region21
    $region20: #{tpu_custom_call.1} parent=1 // pred_region
      %42 = dma.done [#allocation7], 2048
    $region21: #{tpu_custom_call.1} parent=1 // pred_fallthru
      _
    %p43 = scmp.eq.s32.totalorder 0, 0
    // Predicated region
    $region22: #{tpu_custom_call.1} parent=1 // pred_check
      %p44 = pneg %p43
    $region23: #{tpu_custom_call.1} parent=1 // pred_check_branch
      %46 = sbr.rel (%p44) target = $region25
    $region24: #{tpu_custom_call.1} parent=1 // pred_region
      %47 = vst [vmem:[#allocation2] sm:$0xff] 0.0
      %48 = vst [vmem:[#allocation2 + $0x8] sm:$0xff] 0.0
    $region25: #{tpu_custom_call.1} parent=1 // pred_fallthru
      _
    %v49 = vld [vmem:[#allocation2] sm:$0xff]
    %v50 = vld [vmem:[#allocation2 + $0x8] sm:$0xff]
    %v51 = vld [vmem:[#allocation3] sm:$0xff]
    %v52 = vld [vmem:[#allocation3 + $0x8] sm:$0xff]
    %v53 = vld [vmem:[#allocation6] sm:$0xff]
    %v54 = vld [vmem:[#allocation6 + $0x8] sm:$0xff]
    %v55 = vld [vmem:[#allocation6 + $0x10] sm:$0xff]
    %v56 = vld [vmem:[#allocation6 + $0x18] sm:$0xff]
    %v57 = vld [vmem:[#allocation6 + $0x20] sm:$0xff]
    %v58 = vld [vmem:[#allocation6 + $0x28] sm:$0xff]
    %v59 = vld [vmem:[#allocation6 + $0x30] sm:$0xff]
    %v60 = vld [vmem:[#allocation6 + $0x38] sm:$0xff]
    %v61 = vld [vmem:[#allocation6 + $0x40] sm:$0xff]
    %v62 = vld [vmem:[#allocation6 + $0x48] sm:$0xff]
    %v63 = vld [vmem:[#allocation6 + $0x50] sm:$0xff]
    %v64 = vld [vmem:[#allocation6 + $0x58] sm:$0xff]
    %v65 = vld [vmem:[#allocation6 + $0x60] sm:$0xff]
    %v66 = vld [vmem:[#allocation6 + $0x68] sm:$0xff]
    %v67 = vld [vmem:[#allocation6 + $0x70] sm:$0xff]
    %v68 = vld [vmem:[#allocation6 + $0x78] sm:$0xff]
    %69 = vmatprep.subr.mxu0 0.0
    %70 = vmatpush1.msra.mxu0 %v53
    %71 = vmatprep.subr.mxu0 0.0
    %72 = vmatpush1.msra.mxu0 %v54
    %73 = vmatprep.subr.mxu0 0.0
    %74 = vmatpush1.msra.mxu0 %v55
    %75 = vmatprep.subr.mxu0 0.0
    %76 = vmatpush1.msra.mxu0 %v56
    %77 = vmatprep.subr.mxu0 0.0
    %78 = vmatpush1.msra.mxu0 %v57
    %79 = vmatprep.subr.mxu0 0.0
    %80 = vmatpush1.msra.mxu0 %v58
    %81 = vmatprep.subr.mxu0 0.0
    %82 = vmatpush1.msra.mxu0 %v59
    %83 = vmatprep.subr.mxu0 0.0
    %84 = vmatpush1.msra.mxu0 %v60
    %85 = vmatprep.subr.mxu0 0.0
    %86 = vmatpush1.msra.mxu0 %v61
    %87 = vmatprep.subr.mxu0 0.0
    %88 = vmatpush1.msra.mxu0 %v62
    %89 = vmatprep.subr.mxu0 0.0
    %90 = vmatpush1.msra.mxu0 %v63
    %91 = vmatprep.subr.mxu0 0.0
    %92 = vmatpush1.msra.mxu0 %v64
    %93 = vmatprep.subr.mxu0 0.0
    %94 = vmatpush1.msra.mxu0 %v65
    %95 = vmatprep.subr.mxu0 0.0
    %96 = vmatpush1.msra.mxu0 %v66
    %97 = vmatprep.subr.mxu0 0.0
    %98 = vmatpush1.msra.mxu0 %v67
    %99 = vmatprep.subr.mxu0 0.0
    %100 = vmatpush1.msra.mxu0 %v68
    %101 = vmatprep.subr.mxu0 0.0
    %102 = vmatpush1.msra.mxu0 0.0
    %103 = vmatprep.subr.mxu0 0.0
    %104 = vmatpush1.msra.mxu0 0.0
    %105 = vmatprep.subr.mxu0 0.0
    %106 = vmatpush1.msra.mxu0 0.0
    %107 = vmatprep.subr.mxu0 0.0
    %108 = vmatpush1.msra.mxu0 0.0
    %109 = vmatprep.subr.mxu0 0.0
    %110 = vmatpush1.msra.mxu0 0.0
    %111 = vmatprep.subr.mxu0 0.0
    %112 = vmatpush1.msra.mxu0 0.0
    %113 = vmatprep.subr.mxu0 0.0
    %114 = vmatpush1.msra.mxu0 0.0
    %115 = vmatprep.subr.mxu0 0.0
    %116 = vmatpush1.msra.mxu0 0.0
    %117 = vmatprep.subr.mxu0 0.0
    %118 = vmatpush1.msra.mxu0 0.0
    %119 = vmatprep.subr.mxu0 0.0
    %120 = vmatpush1.msra.mxu0 0.0
    %121 = vmatprep.subr.mxu0 0.0
    %122 = vmatpush1.msra.mxu0 0.0
    %123 = vmatprep.subr.mxu0 0.0
    %124 = vmatpush1.msra.mxu0 0.0
    %125 = vmatprep.subr.mxu0 0.0
    %126 = vmatpush1.msra.mxu0 0.0
    %127 = vmatprep.subr.mxu0 0.0
    %128 = vmatpush1.msra.mxu0 0.0
    %129 = vmatprep.subr.mxu0 0.0
    %130 = vmatpush1.msra.mxu0 0.0
    %131 = vmatprep.subr.mxu0 0.0
    %132 = vmatpush1.msra.mxu0 0.0
    %133 = vmatprep.mubr.f32.mxu0 0.0
    %134 = vmatmul.mubr.f32.gmra.mrb[0].mxu0 %v51
    %v135 = vpop.f32.mrb[0].mxu0
    %v136 = vadd.f32 0.0, %v135
    %v137 = vpop.f32.mrb[0].mxu0
    %138 = vmatprep.mubr.f32.mxu0 0.0
    %139 = vmatmul.mubr.f32.gmra.mrb[0].mxu0 %v52
    %v140 = vpop.f32.mrb[0].mxu0
    %v141 = vadd.f32 0.0, %v140
    %v142 = vpop.f32.mrb[0].mxu0
    %143 = vdwg.mxu0
    %v144 = vadd.f32 %v49, %v136
    %v145 = vadd.f32 %v50, %v141
    %146 = vst [vmem:[#allocation2] sm:$0xff] %v144
    %147 = vst [vmem:[#allocation2 + $0x8] sm:$0xff] %v145
    // Predicated region
    $region26: #{tpu_custom_call.1} parent=1 // pred_check
      %p148 = pneg %p43
    $region27: #{tpu_custom_call.1} parent=1 // pred_check_branch
      %150 = sbr.rel (%p148) target = $region29
    $region28: #{tpu_custom_call.1} parent=1 // pred_region
      %v151 = vld [vmem:[#allocation2] sm:$0xff]
      %v152 = vld [vmem:[#allocation2 + $0x8] sm:$0xff]
      %v153 = vld [vmem:[%s2] sm:$0x1]
      %v155 = vlaneseq
      %v156 = vshrl.u32 %v155, 7
      %v157 = vsub.s32 0, %v156
      %v158 = vrot.slane %v153, %v157
      %v160 = vadd.f32 %v151, %v158
      %v161 = vadd.f32 %v152, %v158
      %v162 = vmax.f32 %v160, 0.0
      %v163 = vmax.f32 %v161, 0.0
      %164 = vst [vmem:[#allocation8] sm:$0xff] %v162
      %165 = vst [vmem:[#allocation8 + $0x8] sm:$0xff] %v163
    $region29: #{tpu_custom_call.1} parent=1 // pred_fallthru
      _
    // Predicated region
    $region30: #{tpu_custom_call.1} parent=1 // pred_check
      _
    $region31: #{tpu_custom_call.1} parent=1 // pred_check_branch
      %167 = sbr.rel (0) target = $region33
    $region32: #{tpu_custom_call.1} parent=1 // pred_region
      %s169 = ssub.s32 256, 256
      %170 = vsyncadd [#allocation5], %s169
      %s171 = sshll.u32 [#allocation8], 4
      %s172 = int_to_ptr.vmem [resolvable:$true] %s171
      %177 = dma.vmem_to_hbm [thread:$0]  %s172, 256, %s3, [#allocation5], 128, 128, 8
    $region33: #{tpu_custom_call.1} parent=1 // pred_fallthru
      _
    // Predicated region
    $region34: #{tpu_custom_call.1} parent=1 // pred_check
      _
    $region35: #{tpu_custom_call.1} parent=1 // pred_check_branch
      %179 = sbr.rel (0) target = $region37
    $region36: #{tpu_custom_call.1} parent=1 // pred_region
      %180 = dma.done [#allocation5], 256
    $region37: #{tpu_custom_call.1} parent=1 // pred_fallthru
      _
    %181 = vsyncpa [#allocation4], 1
    %182 = vsyncpa [#allocation7], 1
    %183 = vsyncpa [#allocation5], 1

</llo_original>
